<compile_context>
chip_gen: v7x
topology: tpu7x:2x2x1
jax: 0.10.0
libtpu: 0.0.40
codegen_flags: <defaults>
</compile_context>

<pallas_src>
import math
import functools

import numpy as np
import jax
import jax.numpy as jnp
from jax.experimental import pallas as pl
from jax.experimental.pallas import tpu as pltpu

# ----------------------------- static configuration -----------------------------
MEG_CHANNELS = 8
HIDDEN_DIMS = [16, 32]
KERNEL_SIZES = [5, 3]
EMBED_DIM = 32
NUM_HEADS = 4
NUM_TX_LAYERS = 2
BATCH = 2
TIME = 16

CW_WIDTH = max(HIDDEN_DIMS + [EMBED_DIM])   # conv/fc weight blob lane width
VEC_WIDTH = 128                             # bias / LN / PE blob lane width
TX_ROWS = 5 * EMBED_DIM                     # packed rows per transformer layer


def _align(n, m):
    return ((n + m - 1) // m) * m


def _conv_cfgs():
    """Static (kernel_size, stride, pad) per conv layer (layer 0: 'same', stride 1)."""
    cfgs = []
    for i, k in enumerate(KERNEL_SIZES):
        stride = 1 if i == 0 else 2
        cfgs.append((k, stride, k // 2))
    return tuple(cfgs)


def _seq_len(T):
    t = T
    for (k, stride, pad) in _conv_cfgs():
        t = (t + 2 * pad - k) // stride + 1
    return t


def _conv_blob_layout():
    """Rows of the packed conv/fc weight blob: (row, k*cin, cin, cout) per conv."""
    entries = []
    row = 0
    cin = MEG_CHANNELS
    for cout, k in zip(HIDDEN_DIMS, KERNEL_SIZES):
        entries.append((row, k * cin, cin, cout))
        row = _align(row + k * cin, 16)
        cin = cout
    fc_row = row
    total = _align(fc_row + HIDDEN_DIMS[-1], 16)
    return tuple(entries), fc_row, total


def _vec_layout(S):
    """Row layout of the packed f32 vector blob (biases, LayerNorm params, PE)."""
    rows = {}
    n_conv = len(HIDDEN_DIMS)
    for i in range(n_conv):
        rows[f"conv_b{i}"] = i
    rows["fc_b"] = n_conv
    rows["pe"] = n_conv + 1
    base = n_conv + 1 + S
    names = ("b_qkv", "b_o", "b_ff1", "b_ff2", "ln1_g", "ln1_b", "ln2_g", "ln2_b")
    for l in range(NUM_TX_LAYERS):
        for j, name in enumerate(names):
            rows[f"{name}{l}"] = base + l * len(names) + j
    total = base + NUM_TX_LAYERS * len(names)
    return rows, _align(total, 8)


def _ds_scratch_shape(T):
    """VMEM scratch used to subsample stride>1 conv layers via a strided read."""
    t = T
    rows, cols = 8, 8
    for (k, stride, pad), cout in zip(_conv_cfgs(), HIDDEN_DIMS):
        t_full = t + 2 * pad - k + 1
        if stride > 1:
            rows, cols = max(rows, t_full), max(cols, cout)
        t = (t + 2 * pad - k) // stride + 1
    return rows, cols


# ----------------------------- fused Pallas kernel -----------------------------
def _meg_kernel(x_ref, cw_ref, tw_ref, vec_ref, o_ref, ds_ref, *,
                S, D, H, n_layers, conv_cfgs, conv_layout, fc_row, fc_in, vrows):
    f32, bf16 = jnp.float32, jnp.bfloat16

    def bdot(a, w_bf16):        # MXU matmul: bf16 operands, f32 accumulation
        return jnp.dot(a.astype(bf16), w_bf16, preferred_element_type=f32)

    def vrow(name, width):      # (1, width) f32 row of the packed vector blob
        r = vrows[name]
        return vec_ref[r:r + 1, 0:width]

    def layer_norm(y, g, b, eps=1e-5):
        mu = jnp.mean(y, axis=-1, keepdims=True)
        var = jnp.mean(jnp.square(y - mu), axis=-1, keepdims=True)
        return (y - mu) * jax.lax.rsqrt(var + eps) * g + b

    # -------- conv stack: Conv1d -> folded (eval) BatchNorm -> ReLU --------
    h = x_ref[...]                                            # [T, Cin] f32
    t_cur = h.shape[0]
    for li, ((k, stride, pad), (row0, nrows, cin, cout)) in enumerate(
            zip(conv_cfgs, conv_layout)):
        w_cat = cw_ref[row0:row0 + nrows, 0:cout]             # [k*cin, cout] bf16
        zp = jnp.zeros((pad, cin), f32)
        h_pad = jnp.concatenate([zp, h, zp], axis=0)          # exact f32 zero padding
        t_full = t_cur + 2 * pad - k + 1
        # im2col via static slices -> one MXU matmul per conv layer (no per-tap matmuls)
        g_cat = jnp.concatenate([h_pad[tap:tap + t_full, :] for tap in range(k)],
                                axis=1)                       # [t_full, k*cin]
        y = jnp.maximum(bdot(g_cat, w_cat) + vrow(f"conv_b{li}", cout), 0.0)
        if stride == 1:
            h, t_cur = y, t_full
        else:
            # stride-s conv == stride-1 conv subsampled: one strided VMEM read.
            t_out = (t_cur + 2 * pad - k) // stride + 1
            ds_ref[0:t_full, 0:cout] = y
            h = ds_ref[pl.ds(0, t_out, stride=stride), pl.ds(0, cout)]
            t_cur = t_out

    # -------- fc + positional encoding (dropout == identity in eval mode) --------
    fc_w = cw_ref[fc_row:fc_row + fc_in, 0:D]
    x2 = bdot(h, fc_w) + vrow("fc_b", D)                      # [S, D]
    pe_row = vrows["pe"]
    x2 = x2 + vec_ref[pe_row:pe_row + S, 0:D]                 # plain VPU add

    # -------- transformer encoder layers (post-norm, ReLU FFN) --------
    Dh = D // H
    scale = 1.0 / math.sqrt(Dh)
    for l in range(n_layers):
        base = l * (5 * D)
        w_qkv = tw_ref[base:base + D, 0:3 * D]
        w_o = tw_ref[base:base + D, 3 * D:4 * D]
        w_ff1 = tw_ref[base:base + D, 4 * D:8 * D]
        w_ff2 = tw_ref[base + D:base + 5 * D, 0:D]

        qkv = (bdot(x2, w_qkv) + vrow(f"b_qkv{l}", 3 * D)).astype(bf16)   # [S, 3D]
        q3 = jnp.stack([qkv[:, hd * Dh:(hd + 1) * Dh] for hd in range(H)], axis=0)
        k3 = jnp.stack([qkv[:, D + hd * Dh:D + (hd + 1) * Dh] for hd in range(H)], axis=0)
        v3 = jnp.stack([qkv[:, 2 * D + hd * Dh:2 * D + (hd + 1) * Dh] for hd in range(H)], axis=0)

        # all heads fused: one batched QK^T, one softmax, one batched PV
        s = jnp.einsum("hqd,hkd->hqk", q3, k3,
                       preferred_element_type=f32) * scale                # [H, S, S]
        m = jnp.max(s, axis=-1, keepdims=True)
        p = jnp.exp(s - m)
        p = p * pl.reciprocal(jnp.sum(p, axis=-1, keepdims=True), approx=False)
        o3 = jnp.einsum("hqk,hkd->hqd", p.astype(bf16), v3,
                        preferred_element_type=f32)                       # [H, S, Dh]
        o_cat = jnp.concatenate([o3[hd] for hd in range(H)], axis=1)      # [S, D]
        attn = bdot(o_cat, w_o) + vrow(f"b_o{l}", D)
        x2 = layer_norm(x2 + attn, vrow(f"ln1_g{l}", D), vrow(f"ln1_b{l}", D))

        ff = jnp.maximum(bdot(x2, w_ff1) + vrow(f"b_ff1{l}", 4 * D), 0.0)
        ff = bdot(ff, w_ff2) + vrow(f"b_ff2{l}", D)
        x2 = layer_norm(x2 + ff, vrow(f"ln2_g{l}", D), vrow(f"ln2_b{l}", D))

    # single store of this batch element's result (no per-row loop)
    o_ref[...] = x2


# ----------------------------- host-side glue -----------------------------
def positional_encoding(max_len, d_model):
    pos = np.arange(max_len, dtype=np.float32)[:, None]
    div = np.exp(np.arange(0, d_model, 2, dtype=np.float32)
                 * (-math.log(10000.0) / d_model))
    pe = np.zeros((max_len, d_model), np.float32)
    pe[:, 0::2] = np.sin(pos * div)
    pe[:, 1::2] = np.cos(pos * div)
    return pe


def init_params(key):
    keys = iter(jax.random.split(key, 64))

    def nrm(shape, scale=0.1):
        return scale * jax.random.normal(next(keys), shape, dtype=jnp.float32)

    params = {"conv": [], "layers": []}
    cin = MEG_CHANNELS
    for cout, k in zip(HIDDEN_DIMS, KERNEL_SIZES):
        params["conv"].append({
            "w": nrm((k, cin, cout)),
            "b": nrm((cout,)),
            "gamma": 1.0 + nrm((cout,), 0.05),
            "beta": nrm((cout,), 0.05),
            "rmean": nrm((cout,), 0.05),
            "rvar": 1.0 + 0.1 * jax.random.uniform(next(keys), (cout,), dtype=jnp.float32),
        })
        cin = cout

    D = EMBED_DIM
    params["fc_w"] = nrm((HIDDEN_DIMS[-1], D))
    params["fc_b"] = nrm((D,))
    for _ in range(NUM_TX_LAYERS):
        params["layers"].append({
            "w_qkv": nrm((D, 3 * D)), "b_qkv": nrm((3 * D,)),
            "w_o": nrm((D, D)), "b_o": nrm((D,)),
            "ln1_g": jnp.ones((D,), jnp.float32), "ln1_b": jnp.zeros((D,), jnp.float32),
            "w_ff1": nrm((D, 4 * D)), "b_ff1": nrm((4 * D,)),
            "w_ff2": nrm((4 * D, D)), "b_ff2": nrm((D,)),
            "ln2_g": jnp.ones((D,), jnp.float32), "ln2_b": jnp.zeros((D,), jnp.float32),
        })
    return params


def pack_params(params, T):
    """Fold eval-mode BatchNorm into conv weights and pack all params into 3 buffers."""
    S = _seq_len(T)
    D = EMBED_DIM
    conv_layout, fc_row, cw_rows = _conv_blob_layout()
    vrows, vec_rows = _vec_layout(S)

    cw = np.zeros((cw_rows, CW_WIDTH), np.float32)
    vec = np.zeros((vec_rows, VEC_WIDTH), np.float32)

    for li, ((row0, nrows, _cin, cout), cp) in enumerate(zip(conv_layout, params["conv"])):
        w = np.asarray(cp["w"], np.float32)                   # (k, cin, cout)
        b = np.asarray(cp["b"], np.float32)
        gamma = np.asarray(cp["gamma"], np.float32)
        beta = np.asarray(cp["beta"], np.float32)
        rmean = np.asarray(cp["rmean"], np.float32)
        rvar = np.asarray(cp["rvar"], np.float32)
        scale = gamma / np.sqrt(rvar + 1e-5)                  # BN fold
        w_eff = w * scale[None, None, :]
        b_eff = b * scale + beta - rmean * scale
        cw[row0:row0 + nrows, 0:cout] = w_eff.reshape(nrows, cout)
        vec[vrows[f"conv_b{li}"], 0:cout] = b_eff

    fc_w = np.asarray(params["fc_w"], np.float32)
    cw[fc_row:fc_row + fc_w.shape[0], 0:D] = fc_w
    vec[vrows["fc_b"], 0:D] = np.asarray(params["fc_b"], np.float32)
    vec[vrows["pe"]:vrows["pe"] + S, 0:D] = positional_encoding(S, D)

    tw = np.zeros((NUM_TX_LAYERS * TX_ROWS, 8 * D), np.float32)
    for l, lp in enumerate(params["layers"]):
        base = l * TX_ROWS
        tw[base:base + D, 0:3 * D] = np.asarray(lp["w_qkv"], np.float32)
        tw[base:base + D, 3 * D:4 * D] = np.asarray(lp["w_o"], np.float32)
        tw[base:base + D, 4 * D:8 * D] = np.asarray(lp["w_ff1"], np.float32)
        tw[base + D:base + 5 * D, 0:D] = np.asarray(lp["w_ff2"], np.float32)
        for name in ("b_qkv", "b_o", "b_ff1", "b_ff2", "ln1_g", "ln1_b", "ln2_g", "ln2_b"):
            v = np.asarray(lp[name], np.float32)
            vec[vrows[f"{name}{l}"], 0:v.shape[0]] = v

    return (jnp.asarray(cw, jnp.bfloat16),      # conv + fc weights (bf16)
            jnp.asarray(tw, jnp.bfloat16),      # transformer weights (bf16)
            jnp.asarray(vec, jnp.float32))      # biases / LayerNorm / PE (f32)


def meg_encoder_forward(x_bct, packed):
    """x_bct: [B, C, T] (PyTorch NCW) -> [B, S, EMBED_DIM]."""
    cw, tw, vec = packed
    B, Cin, T = x_bct.shape
    S, D = _seq_len(T), EMBED_DIM
    conv_layout, fc_row, _ = _conv_blob_layout()
    vrows, _ = _vec_layout(S)

    # channels-last, batch folded into rows: [B*T, Cin]
    x2d = jnp.transpose(x_bct, (0, 2, 1)).reshape(B * T, Cin).astype(jnp.float32)

    kernel = functools.partial(
        _meg_kernel, S=S, D=D, H=NUM_HEADS, n_layers=NUM_TX_LAYERS,
        conv_cfgs=_conv_cfgs(), conv_layout=conv_layout,
        fc_row=fc_row, fc_in=HIDDEN_DIMS[-1], vrows=vrows)

    out2d = pl.pallas_call(
        kernel,
        out_shape=jax.ShapeDtypeStruct((B * S, D), jnp.float32),
        grid=(B,),
        in_specs=[
            pl.BlockSpec((T, Cin), lambda b: (b, 0)),        # this batch's time slab
            pl.BlockSpec(cw.shape, lambda b: (0, 0)),        # packed conv/fc weights
            pl.BlockSpec(tw.shape, lambda b: (0, 0)),        # packed transformer weights
            pl.BlockSpec(vec.shape, lambda b: (0, 0)),       # packed biases / LN / PE
        ],
        out_specs=pl.BlockSpec((S, D), lambda b: (b, 0)),
        scratch_shapes=[pltpu.VMEM(_ds_scratch_shape(T), jnp.float32)],
        compiler_params=pltpu.CompilerParams(
            dimension_semantics=("parallel",)),              # batch on both v7x cores
    )(x2d, cw, tw, vec)
    return out2d.reshape(B, S, D)


# ----------------------------- main -----------------------------
if __name__ == "__main__":
    key = jax.random.PRNGKey(0)
    k_params, k_x = jax.random.split(key)
    params = init_params(k_params)
    packed = pack_params(params, TIME)

    x = jax.random.normal(k_x, (BATCH, MEG_CHANNELS, TIME), dtype=jnp.float32)

    fwd = jax.jit(meg_encoder_forward)
    out = jax.block_until_ready(fwd(x, packed))

    expected_seq = _seq_len(TIME)            # 16 -> 16 ('same') -> 8 (stride 2)
    assert out.shape == (BATCH, expected_seq, EMBED_DIM), out.shape
    assert bool(jnp.all(jnp.isfinite(out)))
    print("KERNEL_OK")
</pallas_src>

<mosaic_0001>
module attributes {stable_mosaic.version = 11 : i64} {
  func.func @_meg_kernel(%arg0: i32, %arg1: memref<16x8xf32, #tpu.memory_space<vmem>>, %arg2: memref<128x32xbf16, #tpu.memory_space<vmem>>, %arg3: memref<320x256xbf16, #tpu.memory_space<vmem>>, %arg4: memref<32x128xf32, #tpu.memory_space<vmem>>, %arg5: memref<8x32xf32, #tpu.memory_space<vmem>>, %arg6: memref<16x32xf32, #tpu.memory_space<vmem>>) attributes {dimension_semantics = [#tpu.dimension_semantics<parallel>], iteration_bounds = array<i64: 2>, scalar_prefetch = 0 : i64, scratch_operands = 1 : i64, tpu.core_type = #tpu.core_type<tc>, window_params = [{transform_indices = @transform_0, window_bounds = array<i64: 16, 8>}, {pipeline_mode = #tpu.pipeline_mode<synchronous>, transform_indices = @transform_1, window_bounds = array<i64: 128, 32>}, {pipeline_mode = #tpu.pipeline_mode<synchronous>, transform_indices = @transform_2, window_bounds = array<i64: 320, 256>}, {pipeline_mode = #tpu.pipeline_mode<synchronous>, transform_indices = @transform_3, window_bounds = array<i64: 32, 128>}, {transform_indices = @transform_4, window_bounds = array<i64: 8, 32>}]} {
    %c0 = arith.constant 0 : index
    %c0_0 = arith.constant 0 : index
    %0 = vector.load %arg1[%c0, %c0_0] : memref<16x8xf32, #tpu.memory_space<vmem>>, vector<16x8xf32>
    %c0_1 = arith.constant 0 : index
    %c0_2 = arith.constant 0 : index
    %1 = vector.load %arg2[%c0_1, %c0_2] : memref<128x32xbf16, #tpu.memory_space<vmem>>, vector<40x16xbf16>
    %cst = arith.constant 0.000000e+00 : f32
    %2 = vector.broadcast %cst : f32 to vector<2x8xf32>
    %3 = tpu.concatenate %2, %0, %2 in 0 : vector<2x8xf32>, vector<16x8xf32>, vector<2x8xf32> -> vector<20x8xf32>
    %4 = vector.extract_strided_slice %3 {offsets = [0, 0], sizes = [16, 8], strides = [1, 1]} : vector<20x8xf32> to vector<16x8xf32>
    %5 = vector.extract_strided_slice %3 {offsets = [1, 0], sizes = [16, 8], strides = [1, 1]} : vector<20x8xf32> to vector<16x8xf32>
    %6 = vector.extract_strided_slice %3 {offsets = [2, 0], sizes = [16, 8], strides = [1, 1]} : vector<20x8xf32> to vector<16x8xf32>
    %7 = vector.extract_strided_slice %3 {offsets = [3, 0], sizes = [16, 8], strides = [1, 1]} : vector<20x8xf32> to vector<16x8xf32>
    %8 = vector.extract_strided_slice %3 {offsets = [4, 0], sizes = [16, 8], strides = [1, 1]} : vector<20x8xf32> to vector<16x8xf32>
    %9 = tpu.concatenate %4, %5, %6, %7, %8 in 1 : vector<16x8xf32>, vector<16x8xf32>, vector<16x8xf32>, vector<16x8xf32>, vector<16x8xf32> -> vector<16x40xf32>
    %10 = arith.truncf %9 : vector<16x40xf32> to vector<16x40xbf16>
    %cst_3 = arith.constant dense<0.000000e+00> : vector<16x16xf32>
    %11 = tpu.matmul %10, %1, %cst_3 {dimension_numbers = #tpu.dot_dimension_numbers<[1], [0], [0], [1], [0, 0, 1, 1], [], []>} : vector<16x40xbf16>, vector<40x16xbf16>, vector<16x16xf32> -> vector<16x16xf32>
    %c0_4 = arith.constant 0 : index
    %c0_5 = arith.constant 0 : index
    %12 = vector.load %arg4[%c0_4, %c0_5] : memref<32x128xf32, #tpu.memory_space<vmem>>, vector<1x16xf32>
    %13 = vector.broadcast %12 : vector<1x16xf32> to vector<16x16xf32>
    %14 = arith.addf %11, %13 : vector<16x16xf32>
    %cst_6 = arith.constant 0.000000e+00 : f32
    %15 = vector.broadcast %cst_6 : f32 to vector<16x16xf32>
    %16 = arith.maximumf %14, %15 : vector<16x16xf32>
    %c48 = arith.constant 48 : index
    %c0_7 = arith.constant 0 : index
    %17 = vector.load %arg2[%c48, %c0_7] : memref<128x32xbf16, #tpu.memory_space<vmem>>, vector<48x32xbf16>
    %cst_8 = arith.constant 0.000000e+00 : f32
    %18 = vector.broadcast %cst_8 : f32 to vector<1x16xf32>
    %19 = tpu.concatenate %18, %16, %18 in 0 : vector<1x16xf32>, vector<16x16xf32>, vector<1x16xf32> -> vector<18x16xf32>
    %20 = vector.extract_strided_slice %19 {offsets = [0, 0], sizes = [16, 16], strides = [1, 1]} : vector<18x16xf32> to vector<16x16xf32>
    %21 = vector.extract_strided_slice %19 {offsets = [1, 0], sizes = [16, 16], strides = [1, 1]} : vector<18x16xf32> to vector<16x16xf32>
    %22 = vector.extract_strided_slice %19 {offsets = [2, 0], sizes = [16, 16], strides = [1, 1]} : vector<18x16xf32> to vector<16x16xf32>
    %23 = tpu.concatenate %20, %21, %22 in 1 : vector<16x16xf32>, vector<16x16xf32>, vector<16x16xf32> -> vector<16x48xf32>
    %24 = arith.truncf %23 : vector<16x48xf32> to vector<16x48xbf16>
    %cst_9 = arith.constant dense<0.000000e+00> : vector<16x32xf32>
    %25 = tpu.matmul %24, %17, %cst_9 {dimension_numbers = #tpu.dot_dimension_numbers<[1], [0], [0], [1], [0, 0, 1, 1], [], []>} : vector<16x48xbf16>, vector<48x32xbf16>, vector<16x32xf32> -> vector<16x32xf32>
    %c1 = arith.constant 1 : index
    %c0_10 = arith.constant 0 : index
    %26 = vector.load %arg4[%c1, %c0_10] : memref<32x128xf32, #tpu.memory_space<vmem>>, vector<1x32xf32>
    %27 = vector.broadcast %26 : vector<1x32xf32> to vector<16x32xf32>
    %28 = arith.addf %25, %27 : vector<16x32xf32>
    %cst_11 = arith.constant 0.000000e+00 : f32
    %29 = vector.broadcast %cst_11 : f32 to vector<16x32xf32>
    %30 = arith.maximumf %28, %29 : vector<16x32xf32>
    %c0_12 = arith.constant 0 : index
    %c0_13 = arith.constant 0 : index
    %31 = vector.load %arg6[%c0_12, %c0_13] : memref<16x32xf32, #tpu.memory_space<vmem>>, vector<16x32xf32>
    tpu.vector_store %arg6[%c0_12, %c0_13], %30 {strides = array<i32>} : memref<16x32xf32, #tpu.memory_space<vmem>>, vector<16x32xf32>,
    %c0_14 = arith.constant 0 : index
    %c0_15 = arith.constant 0 : index
    %32 = tpu.strided_load %arg6[%c0_14, %c0_15] {strides = array<i32: 2, 1>} : memref<16x32xf32, #tpu.memory_space<vmem>>, vector<8x32xf32>
    %c96 = arith.constant 96 : index
    %c0_16 = arith.constant 0 : index
    %33 = vector.load %arg2[%c96, %c0_16] : memref<128x32xbf16, #tpu.memory_space<vmem>>, vector<32x32xbf16>
    %34 = arith.truncf %32 : vector<8x32xf32> to vector<8x32xbf16>
    %cst_17 = arith.constant dense<0.000000e+00> : vector<8x32xf32>
    %35 = tpu.matmul %34, %33, %cst_17 {dimension_numbers = #tpu.dot_dimension_numbers<[1], [0], [0], [1], [0, 0, 1, 1], [], []>} : vector<8x32xbf16>, vector<32x32xbf16>, vector<8x32xf32> -> vector<8x32xf32>
    %c2 = arith.constant 2 : index
    %c0_18 = arith.constant 0 : index
    %36 = vector.load %arg4[%c2, %c0_18] : memref<32x128xf32, #tpu.memory_space<vmem>>, vector<1x32xf32>
    %37 = vector.broadcast %36 : vector<1x32xf32> to vector<8x32xf32>
    %38 = arith.addf %35, %37 : vector<8x32xf32>
    %c3 = arith.constant 3 : index
    %c0_19 = arith.constant 0 : index
    %39 = vector.load %arg4[%c3, %c0_19] : memref<32x128xf32, #tpu.memory_space<vmem>>, vector<8x32xf32>
    %40 = arith.addf %38, %39 : vector<8x32xf32>
    %c0_20 = arith.constant 0 : index
    %c0_21 = arith.constant 0 : index
    %41 = vector.load %arg3[%c0_20, %c0_21] : memref<320x256xbf16, #tpu.memory_space<vmem>>, vector<32x96xbf16>
    %c0_22 = arith.constant 0 : index
    %c96_23 = arith.constant 96 : index
    %42 = vector.load %arg3[%c0_22, %c96_23] : memref<320x256xbf16, #tpu.memory_space<vmem>>, vector<32x32xbf16>
    %c0_24 = arith.constant 0 : index
    %c128 = arith.constant 128 : index
    %43 = vector.load %arg3[%c0_24, %c128] : memref<320x256xbf16, #tpu.memory_space<vmem>>, vector<32x128xbf16>
    %c32 = arith.constant 32 : index
    %c0_25 = arith.constant 0 : index
    %44 = vector.load %arg3[%c32, %c0_25] : memref<320x256xbf16, #tpu.memory_space<vmem>>, vector<128x32xbf16>
    %45 = arith.truncf %40 : vector<8x32xf32> to vector<8x32xbf16>
    %cst_26 = arith.constant dense<0.000000e+00> : vector<8x96xf32>
    %46 = tpu.matmul %45, %41, %cst_26 {dimension_numbers = #tpu.dot_dimension_numbers<[1], [0], [0], [1], [0, 0, 1, 1], [], []>} : vector<8x32xbf16>, vector<32x96xbf16>, vector<8x96xf32> -> vector<8x96xf32>
    %c11 = arith.constant 11 : index
    %c0_27 = arith.constant 0 : index
    %47 = vector.load %arg4[%c11, %c0_27] : memref<32x128xf32, #tpu.memory_space<vmem>>, vector<1x96xf32>
    %48 = vector.broadcast %47 : vector<1x96xf32> to vector<8x96xf32>
    %49 = arith.addf %46, %48 : vector<8x96xf32>
    %50 = arith.truncf %49 : vector<8x96xf32> to vector<8x96xbf16>
    %51 = vector.extract_strided_slice %50 {offsets = [0, 0], sizes = [8, 8], strides = [1, 1]} : vector<8x96xbf16> to vector<8x8xbf16>
    %52 = vector.extract_strided_slice %50 {offsets = [0, 8], sizes = [8, 8], strides = [1, 1]} : vector<8x96xbf16> to vector<8x8xbf16>
    %53 = vector.extract_strided_slice %50 {offsets = [0, 16], sizes = [8, 8], strides = [1, 1]} : vector<8x96xbf16> to vector<8x8xbf16>
    %54 = vector.extract_strided_slice %50 {offsets = [0, 24], sizes = [8, 8], strides = [1, 1]} : vector<8x96xbf16> to vector<8x8xbf16>
    %55 = vector.shape_cast %51 : vector<8x8xbf16> to vector<1x8x8xbf16>
    %56 = vector.shape_cast %52 : vector<8x8xbf16> to vector<1x8x8xbf16>
    %57 = vector.shape_cast %53 : vector<8x8xbf16> to vector<1x8x8xbf16>
    %58 = vector.shape_cast %54 : vector<8x8xbf16> to vector<1x8x8xbf16>
    %59 = tpu.concatenate %55, %56, %57, %58 in 0 : vector<1x8x8xbf16>, vector<1x8x8xbf16>, vector<1x8x8xbf16>, vector<1x8x8xbf16> -> vector<4x8x8xbf16>
    %60 = vector.extract_strided_slice %50 {offsets = [0, 32], sizes = [8, 8], strides = [1, 1]} : vector<8x96xbf16> to vector<8x8xbf16>
    %61 = vector.extract_strided_slice %50 {offsets = [0, 40], sizes = [8, 8], strides = [1, 1]} : vector<8x96xbf16> to vector<8x8xbf16>
    %62 = vector.extract_strided_slice %50 {offsets = [0, 48], sizes = [8, 8], strides = [1, 1]} : vector<8x96xbf16> to vector<8x8xbf16>
    %63 = vector.extract_strided_slice %50 {offsets = [0, 56], sizes = [8, 8], strides = [1, 1]} : vector<8x96xbf16> to vector<8x8xbf16>
    %64 = vector.shape_cast %60 : vector<8x8xbf16> to vector<1x8x8xbf16>
    %65 = vector.shape_cast %61 : vector<8x8xbf16> to vector<1x8x8xbf16>
    %66 = vector.shape_cast %62 : vector<8x8xbf16> to vector<1x8x8xbf16>
    %67 = vector.shape_cast %63 : vector<8x8xbf16> to vector<1x8x8xbf16>
    %68 = tpu.concatenate %64, %65, %66, %67 in 0 : vector<1x8x8xbf16>, vector<1x8x8xbf16>, vector<1x8x8xbf16>, vector<1x8x8xbf16> -> vector<4x8x8xbf16>
    %69 = vector.extract_strided_slice %50 {offsets = [0, 64], sizes = [8, 8], strides = [1, 1]} : vector<8x96xbf16> to vector<8x8xbf16>
    %70 = vector.extract_strided_slice %50 {offsets = [0, 72], sizes = [8, 8], strides = [1, 1]} : vector<8x96xbf16> to vector<8x8xbf16>
    %71 = vector.extract_strided_slice %50 {offsets = [0, 80], sizes = [8, 8], strides = [1, 1]} : vector<8x96xbf16> to vector<8x8xbf16>
    %72 = vector.extract_strided_slice %50 {offsets = [0, 88], sizes = [8, 8], strides = [1, 1]} : vector<8x96xbf16> to vector<8x8xbf16>
    %73 = vector.shape_cast %69 : vector<8x8xbf16> to vector<1x8x8xbf16>
    %74 = vector.shape_cast %70 : vector<8x8xbf16> to vector<1x8x8xbf16>
    %75 = vector.shape_cast %71 : vector<8x8xbf16> to vector<1x8x8xbf16>
    %76 = vector.shape_cast %72 : vector<8x8xbf16> to vector<1x8x8xbf16>
    %77 = tpu.concatenate %73, %74, %75, %76 in 0 : vector<1x8x8xbf16>, vector<1x8x8xbf16>, vector<1x8x8xbf16>, vector<1x8x8xbf16> -> vector<4x8x8xbf16>
    "tpu.trace_start"() <{level = 10 : i32, message = "hqd,hkd->hqk"}> : () -> ()
    %cst_28 = arith.constant dense<0.000000e+00> : vector<4x8x8xf32>
    %78 = tpu.matmul %59, %68, %cst_28 {dimension_numbers = #tpu.dot_dimension_numbers<[2], [2], [1], [1], [0, 0, 0, 1, 1, 1], [0], [0]>} : vector<4x8x8xbf16>, vector<4x8x8xbf16>, vector<4x8x8xf32> -> vector<4x8x8xf32>
    "tpu.trace_stop"() : () -> ()
    %cst_29 = arith.constant 0.353553385 : f32
    %79 = vector.broadcast %cst_29 : f32 to vector<4x8x8xf32>
    %80 = arith.mulf %78, %79 : vector<4x8x8xf32>
    %cst_30 = arith.constant dense<0xFF800000> : vector<4x8xf32>
    %81 = vector.multi_reduction <maximumf>, %80, %cst_30 [2] : vector<4x8x8xf32> to vector<4x8xf32>
    %82 = vector.shape_cast %81 : vector<4x8xf32> to vector<4x8x1xf32>
    %83 = vector.broadcast %82 : vector<4x8x1xf32> to vector<4x8x8xf32>
    %84 = arith.subf %80, %83 : vector<4x8x8xf32>
    %85 = math.exp %84 : vector<4x8x8xf32>
    %cst_31 = arith.constant dense<0.000000e+00> : vector<4x8xf32>
    %86 = vector.multi_reduction <add>, %85, %cst_31 [2] : vector<4x8x8xf32> to vector<4x8xf32>
    %87 = vector.shape_cast %86 : vector<4x8xf32> to vector<4x8x1xf32>
    %88 = tpu.reciprocal %87 : vector<4x8x1xf32> -> vector<4x8x1xf32>
    %89 = vector.broadcast %88 : vector<4x8x1xf32> to vector<4x8x8xf32>
    %90 = arith.mulf %85, %89 : vector<4x8x8xf32>
    %91 = arith.truncf %90 : vector<4x8x8xf32> to vector<4x8x8xbf16>
    "tpu.trace_start"() <{level = 10 : i32, message = "hqk,hkd->hqd"}> : () -> ()
    %cst_32 = arith.constant dense<0.000000e+00> : vector<4x8x8xf32>
    %92 = tpu.matmul %91, %77, %cst_32 {dimension_numbers = #tpu.dot_dimension_numbers<[2], [1], [1], [2], [0, 0, 0, 1, 1, 2], [0], [0]>} : vector<4x8x8xbf16>, vector<4x8x8xbf16>, vector<4x8x8xf32> -> vector<4x8x8xf32>
    "tpu.trace_stop"() : () -> ()
    %93 = vector.extract_strided_slice %92 {offsets = [0, 0, 0], sizes = [1, 8, 8], strides = [1, 1, 1]} : vector<4x8x8xf32> to vector<1x8x8xf32>
    %94 = vector.shape_cast %93 : vector<1x8x8xf32> to vector<8x8xf32>
    %95 = vector.extract_strided_slice %92 {offsets = [1, 0, 0], sizes = [1, 8, 8], strides = [1, 1, 1]} : vector<4x8x8xf32> to vector<1x8x8xf32>
    %96 = vector.shape_cast %95 : vector<1x8x8xf32> to vector<8x8xf32>
    %97 = vector.extract_strided_slice %92 {offsets = [2, 0, 0], sizes = [1, 8, 8], strides = [1, 1, 1]} : vector<4x8x8xf32> to vector<1x8x8xf32>
    %98 = vector.shape_cast %97 : vector<1x8x8xf32> to vector<8x8xf32>
    %99 = vector.extract_strided_slice %92 {offsets = [3, 0, 0], sizes = [1, 8, 8], strides = [1, 1, 1]} : vector<4x8x8xf32> to vector<1x8x8xf32>
    %100 = vector.shape_cast %99 : vector<1x8x8xf32> to vector<8x8xf32>
    %101 = tpu.concatenate %94, %96, %98, %100 in 1 : vector<8x8xf32>, vector<8x8xf32>, vector<8x8xf32>, vector<8x8xf32> -> vector<8x32xf32>
    %102 = arith.truncf %101 : vector<8x32xf32> to vector<8x32xbf16>
    %cst_33 = arith.constant dense<0.000000e+00> : vector<8x32xf32>
    %103 = tpu.matmul %102, %42, %cst_33 {dimension_numbers = #tpu.dot_dimension_numbers<[1], [0], [0], [1], [0, 0, 1, 1], [], []>} : vector<8x32xbf16>, vector<32x32xbf16>, vector<8x32xf32> -> vector<8x32xf32>
    %c12 = arith.constant 12 : index
    %c0_34 = arith.constant 0 : index
    %104 = vector.load %arg4[%c12, %c0_34] : memref<32x128xf32, #tpu.memory_space<vmem>>, vector<1x32xf32>
    %105 = vector.broadcast %104 : vector<1x32xf32> to vector<8x32xf32>
    %106 = arith.addf %103, %105 : vector<8x32xf32>
    %107 = arith.addf %40, %106 : vector<8x32xf32>
    %c15 = arith.constant 15 : index
    %c0_35 = arith.constant 0 : index
    %108 = vector.load %arg4[%c15, %c0_35] : memref<32x128xf32, #tpu.memory_space<vmem>>, vector<1x32xf32>
    %c16 = arith.constant 16 : index
    %c0_36 = arith.constant 0 : index
    %109 = vector.load %arg4[%c16, %c0_36] : memref<32x128xf32, #tpu.memory_space<vmem>>, vector<1x32xf32>
    %cst_37 = arith.constant dense<0.000000e+00> : vector<8xf32>
    %110 = vector.multi_reduction <add>, %107, %cst_37 [1] : vector<8x32xf32> to vector<8xf32>
    %111 = vector.shape_cast %110 : vector<8xf32> to vector<8x1xf32>
    %cst_38 = arith.constant 3.200000e+01 : f32
    %112 = vector.broadcast %cst_38 : f32 to vector<8x1xf32>
    %113 = arith.divf %111, %112 : vector<8x1xf32>
    %114 = vector.broadcast %113 : vector<8x1xf32> to vector<8x32xf32>
    %115 = arith.subf %107, %114 : vector<8x32xf32>
    %116 = arith.mulf %115, %115 : vector<8x32xf32>
    %cst_39 = arith.constant dense<0.000000e+00> : vector<8xf32>
    %117 = vector.multi_reduction <add>, %116, %cst_39 [1] : vector<8x32xf32> to vector<8xf32>
    %118 = vector.shape_cast %117 : vector<8xf32> to vector<8x1xf32>
    %cst_40 = arith.constant 3.200000e+01 : f32
    %119 = vector.broadcast %cst_40 : f32 to vector<8x1xf32>
    %120 = arith.divf %118, %119 : vector<8x1xf32>
    %121 = vector.broadcast %113 : vector<8x1xf32> to vector<8x32xf32>
    %122 = arith.subf %107, %121 : vector<8x32xf32>
    %cst_41 = arith.constant 9.99999974E-6 : f32
    %123 = vector.broadcast %cst_41 : f32 to vector<8x1xf32>
    %124 = arith.addf %120, %123 : vector<8x1xf32>
    %125 = math.rsqrt %124 : vector<8x1xf32>
    %126 = vector.broadcast %125 : vector<8x1xf32> to vector<8x32xf32>
    %127 = arith.mulf %122, %126 : vector<8x32xf32>
    %128 = vector.broadcast %108 : vector<1x32xf32> to vector<8x32xf32>
    %129 = arith.mulf %127, %128 : vector<8x32xf32>
    %130 = vector.broadcast %109 : vector<1x32xf32> to vector<8x32xf32>
    %131 = arith.addf %129, %130 : vector<8x32xf32>
    %132 = arith.truncf %131 : vector<8x32xf32> to vector<8x32xbf16>
    %cst_42 = arith.constant dense<0.000000e+00> : vector<8x128xf32>
    %133 = tpu.matmul %132, %43, %cst_42 {dimension_numbers = #tpu.dot_dimension_numbers<[1], [0], [0], [1], [0, 0, 1, 1], [], []>} : vector<8x32xbf16>, vector<32x128xbf16>, vector<8x128xf32> -> vector<8x128xf32>
    %c13 = arith.constant 13 : index
    %c0_43 = arith.constant 0 : index
    %134 = vector.load %arg4[%c13, %c0_43] : memref<32x128xf32, #tpu.memory_space<vmem>>, vector<1x128xf32>
    %135 = vector.broadcast %134 : vector<1x128xf32> to vector<8x128xf32>
    %136 = arith.addf %133, %135 : vector<8x128xf32>
    %cst_44 = arith.constant 0.000000e+00 : f32
    %137 = vector.broadcast %cst_44 : f32 to vector<8x128xf32>
    %138 = arith.maximumf %136, %137 : vector<8x128xf32>
    %139 = arith.truncf %138 : vector<8x128xf32> to vector<8x128xbf16>
    %cst_45 = arith.constant dense<0.000000e+00> : vector<8x32xf32>
    %140 = tpu.matmul %139, %44, %cst_45 {dimension_numbers = #tpu.dot_dimension_numbers<[1], [0], [0], [1], [0, 0, 1, 1], [], []>} : vector<8x128xbf16>, vector<128x32xbf16>, vector<8x32xf32> -> vector<8x32xf32>
    %c14 = arith.constant 14 : index
    %c0_46 = arith.constant 0 : index
    %141 = vector.load %arg4[%c14, %c0_46] : memref<32x128xf32, #tpu.memory_space<vmem>>, vector<1x32xf32>
    %142 = vector.broadcast %141 : vector<1x32xf32> to vector<8x32xf32>
    %143 = arith.addf %140, %142 : vector<8x32xf32>
    %144 = arith.addf %131, %143 : vector<8x32xf32>
    %c17 = arith.constant 17 : index
    %c0_47 = arith.constant 0 : index
    %145 = vector.load %arg4[%c17, %c0_47] : memref<32x128xf32, #tpu.memory_space<vmem>>, vector<1x32xf32>
    %c18 = arith.constant 18 : index
    %c0_48 = arith.constant 0 : index
    %146 = vector.load %arg4[%c18, %c0_48] : memref<32x128xf32, #tpu.memory_space<vmem>>, vector<1x32xf32>
    %cst_49 = arith.constant dense<0.000000e+00> : vector<8xf32>
    %147 = vector.multi_reduction <add>, %144, %cst_49 [1] : vector<8x32xf32> to vector<8xf32>
    %148 = vector.shape_cast %147 : vector<8xf32> to vector<8x1xf32>
    %cst_50 = arith.constant 3.200000e+01 : f32
    %149 = vector.broadcast %cst_50 : f32 to vector<8x1xf32>
    %150 = arith.divf %148, %149 : vector<8x1xf32>
    %151 = vector.broadcast %150 : vector<8x1xf32> to vector<8x32xf32>
    %152 = arith.subf %144, %151 : vector<8x32xf32>
    %153 = arith.mulf %152, %152 : vector<8x32xf32>
    %cst_51 = arith.constant dense<0.000000e+00> : vector<8xf32>
    %154 = vector.multi_reduction <add>, %153, %cst_51 [1] : vector<8x32xf32> to vector<8xf32>
    %155 = vector.shape_cast %154 : vector<8xf32> to vector<8x1xf32>
    %cst_52 = arith.constant 3.200000e+01 : f32
    %156 = vector.broadcast %cst_52 : f32 to vector<8x1xf32>
    %157 = arith.divf %155, %156 : vector<8x1xf32>
    %158 = vector.broadcast %150 : vector<8x1xf32> to vector<8x32xf32>
    %159 = arith.subf %144, %158 : vector<8x32xf32>
    %cst_53 = arith.constant 9.99999974E-6 : f32
    %160 = vector.broadcast %cst_53 : f32 to vector<8x1xf32>
    %161 = arith.addf %157, %160 : vector<8x1xf32>
    %162 = math.rsqrt %161 : vector<8x1xf32>
    %163 = vector.broadcast %162 : vector<8x1xf32> to vector<8x32xf32>
    %164 = arith.mulf %159, %163 : vector<8x32xf32>
    %165 = vector.broadcast %145 : vector<1x32xf32> to vector<8x32xf32>
    %166 = arith.mulf %164, %165 : vector<8x32xf32>
    %167 = vector.broadcast %146 : vector<1x32xf32> to vector<8x32xf32>
    %168 = arith.addf %166, %167 : vector<8x32xf32>
    %c160 = arith.constant 160 : index
    %c0_54 = arith.constant 0 : index
    %169 = vector.load %arg3[%c160, %c0_54] : memref<320x256xbf16, #tpu.memory_space<vmem>>, vector<32x96xbf16>
    %c160_55 = arith.constant 160 : index
    %c96_56 = arith.constant 96 : index
    %170 = vector.load %arg3[%c160_55, %c96_56] : memref<320x256xbf16, #tpu.memory_space<vmem>>, vector<32x32xbf16>
    %c160_57 = arith.constant 160 : index
    %c128_58 = arith.constant 128 : index
    %171 = vector.load %arg3[%c160_57, %c128_58] : memref<320x256xbf16, #tpu.memory_space<vmem>>, vector<32x128xbf16>
    %c192 = arith.constant 192 : index
    %c0_59 = arith.constant 0 : index
    %172 = vector.load %arg3[%c192, %c0_59] : memref<320x256xbf16, #tpu.memory_space<vmem>>, vector<128x32xbf16>
    %173 = arith.truncf %168 : vector<8x32xf32> to vector<8x32xbf16>
    %cst_60 = arith.constant dense<0.000000e+00> : vector<8x96xf32>
    %174 = tpu.matmul %173, %169, %cst_60 {dimension_numbers = #tpu.dot_dimension_numbers<[1], [0], [0], [1], [0, 0, 1, 1], [], []>} : vector<8x32xbf16>, vector<32x96xbf16>, vector<8x96xf32> -> vector<8x96xf32>
    %c19 = arith.constant 19 : index
    %c0_61 = arith.constant 0 : index
    %175 = vector.load %arg4[%c19, %c0_61] : memref<32x128xf32, #tpu.memory_space<vmem>>, vector<1x96xf32>
    %176 = vector.broadcast %175 : vector<1x96xf32> to vector<8x96xf32>
    %177 = arith.addf %174, %176 : vector<8x96xf32>
    %178 = arith.truncf %177 : vector<8x96xf32> to vector<8x96xbf16>
    %179 = vector.extract_strided_slice %178 {offsets = [0, 0], sizes = [8, 8], strides = [1, 1]} : vector<8x96xbf16> to vector<8x8xbf16>
    %180 = vector.extract_strided_slice %178 {offsets = [0, 8], sizes = [8, 8], strides = [1, 1]} : vector<8x96xbf16> to vector<8x8xbf16>
    %181 = vector.extract_strided_slice %178 {offsets = [0, 16], sizes = [8, 8], strides = [1, 1]} : vector<8x96xbf16> to vector<8x8xbf16>
    %182 = vector.extract_strided_slice %178 {offsets = [0, 24], sizes = [8, 8], strides = [1, 1]} : vector<8x96xbf16> to vector<8x8xbf16>
    %183 = vector.shape_cast %179 : vector<8x8xbf16> to vector<1x8x8xbf16>
    %184 = vector.shape_cast %180 : vector<8x8xbf16> to vector<1x8x8xbf16>
    %185 = vector.shape_cast %181 : vector<8x8xbf16> to vector<1x8x8xbf16>
    %186 = vector.shape_cast %182 : vector<8x8xbf16> to vector<1x8x8xbf16>
    %187 = tpu.concatenate %183, %184, %185, %186 in 0 : vector<1x8x8xbf16>, vector<1x8x8xbf16>, vector<1x8x8xbf16>, vector<1x8x8xbf16> -> vector<4x8x8xbf16>
    %188 = vector.extract_strided_slice %178 {offsets = [0, 32], sizes = [8, 8], strides = [1, 1]} : vector<8x96xbf16> to vector<8x8xbf16>
    %189 = vector.extract_strided_slice %178 {offsets = [0, 40], sizes = [8, 8], strides = [1, 1]} : vector<8x96xbf16> to vector<8x8xbf16>
    %190 = vector.extract_strided_slice %178 {offsets = [0, 48], sizes = [8, 8], strides = [1, 1]} : vector<8x96xbf16> to vector<8x8xbf16>
    %191 = vector.extract_strided_slice %178 {offsets = [0, 56], sizes = [8, 8], strides = [1, 1]} : vector<8x96xbf16> to vector<8x8xbf16>
    %192 = vector.shape_cast %188 : vector<8x8xbf16> to vector<1x8x8xbf16>
    %193 = vector.shape_cast %189 : vector<8x8xbf16> to vector<1x8x8xbf16>
    %194 = vector.shape_cast %190 : vector<8x8xbf16> to vector<1x8x8xbf16>
    %195 = vector.shape_cast %191 : vector<8x8xbf16> to vector<1x8x8xbf16>
    %196 = tpu.concatenate %192, %193, %194, %195 in 0 : vector<1x8x8xbf16>, vector<1x8x8xbf16>, vector<1x8x8xbf16>, vector<1x8x8xbf16> -> vector<4x8x8xbf16>
    %197 = vector.extract_strided_slice %178 {offsets = [0, 64], sizes = [8, 8], strides = [1, 1]} : vector<8x96xbf16> to vector<8x8xbf16>
    %198 = vector.extract_strided_slice %178 {offsets = [0, 72], sizes = [8, 8], strides = [1, 1]} : vector<8x96xbf16> to vector<8x8xbf16>
    %199 = vector.extract_strided_slice %178 {offsets = [0, 80], sizes = [8, 8], strides = [1, 1]} : vector<8x96xbf16> to vector<8x8xbf16>
    %200 = vector.extract_strided_slice %178 {offsets = [0, 88], sizes = [8, 8], strides = [1, 1]} : vector<8x96xbf16> to vector<8x8xbf16>
    %201 = vector.shape_cast %197 : vector<8x8xbf16> to vector<1x8x8xbf16>
    %202 = vector.shape_cast %198 : vector<8x8xbf16> to vector<1x8x8xbf16>
    %203 = vector.shape_cast %199 : vector<8x8xbf16> to vector<1x8x8xbf16>
    %204 = vector.shape_cast %200 : vector<8x8xbf16> to vector<1x8x8xbf16>
    %205 = tpu.concatenate %201, %202, %203, %204 in 0 : vector<1x8x8xbf16>, vector<1x8x8xbf16>, vector<1x8x8xbf16>, vector<1x8x8xbf16> -> vector<4x8x8xbf16>
    "tpu.trace_start"() <{level = 10 : i32, message = "hqd,hkd->hqk"}> : () -> ()
    %cst_62 = arith.constant dense<0.000000e+00> : vector<4x8x8xf32>
    %206 = tpu.matmul %187, %196, %cst_62 {dimension_numbers = #tpu.dot_dimension_numbers<[2], [2], [1], [1], [0, 0, 0, 1, 1, 1], [0], [0]>} : vector<4x8x8xbf16>, vector<4x8x8xbf16>, vector<4x8x8xf32> -> vector<4x8x8xf32>
    "tpu.trace_stop"() : () -> ()
    %cst_63 = arith.constant 0.353553385 : f32
    %207 = vector.broadcast %cst_63 : f32 to vector<4x8x8xf32>
    %208 = arith.mulf %206, %207 : vector<4x8x8xf32>
    %cst_64 = arith.constant dense<0xFF800000> : vector<4x8xf32>
    %209 = vector.multi_reduction <maximumf>, %208, %cst_64 [2] : vector<4x8x8xf32> to vector<4x8xf32>
    %210 = vector.shape_cast %209 : vector<4x8xf32> to vector<4x8x1xf32>
    %211 = vector.broadcast %210 : vector<4x8x1xf32> to vector<4x8x8xf32>
    %212 = arith.subf %208, %211 : vector<4x8x8xf32>
    %213 = math.exp %212 : vector<4x8x8xf32>
    %cst_65 = arith.constant dense<0.000000e+00> : vector<4x8xf32>
    %214 = vector.multi_reduction <add>, %213, %cst_65 [2] : vector<4x8x8xf32> to vector<4x8xf32>
    %215 = vector.shape_cast %214 : vector<4x8xf32> to vector<4x8x1xf32>
    %216 = tpu.reciprocal %215 : vector<4x8x1xf32> -> vector<4x8x1xf32>
    %217 = vector.broadcast %216 : vector<4x8x1xf32> to vector<4x8x8xf32>
    %218 = arith.mulf %213, %217 : vector<4x8x8xf32>
    %219 = arith.truncf %218 : vector<4x8x8xf32> to vector<4x8x8xbf16>
    "tpu.trace_start"() <{level = 10 : i32, message = "hqk,hkd->hqd"}> : () -> ()
    %cst_66 = arith.constant dense<0.000000e+00> : vector<4x8x8xf32>
    %220 = tpu.matmul %219, %205, %cst_66 {dimension_numbers = #tpu.dot_dimension_numbers<[2], [1], [1], [2], [0, 0, 0, 1, 1, 2], [0], [0]>} : vector<4x8x8xbf16>, vector<4x8x8xbf16>, vector<4x8x8xf32> -> vector<4x8x8xf32>
    "tpu.trace_stop"() : () -> ()
    %221 = vector.extract_strided_slice %220 {offsets = [0, 0, 0], sizes = [1, 8, 8], strides = [1, 1, 1]} : vector<4x8x8xf32> to vector<1x8x8xf32>
    %222 = vector.shape_cast %221 : vector<1x8x8xf32> to vector<8x8xf32>
    %223 = vector.extract_strided_slice %220 {offsets = [1, 0, 0], sizes = [1, 8, 8], strides = [1, 1, 1]} : vector<4x8x8xf32> to vector<1x8x8xf32>
    %224 = vector.shape_cast %223 : vector<1x8x8xf32> to vector<8x8xf32>
    %225 = vector.extract_strided_slice %220 {offsets = [2, 0, 0], sizes = [1, 8, 8], strides = [1, 1, 1]} : vector<4x8x8xf32> to vector<1x8x8xf32>
    %226 = vector.shape_cast %225 : vector<1x8x8xf32> to vector<8x8xf32>
    %227 = vector.extract_strided_slice %220 {offsets = [3, 0, 0], sizes = [1, 8, 8], strides = [1, 1, 1]} : vector<4x8x8xf32> to vector<1x8x8xf32>
    %228 = vector.shape_cast %227 : vector<1x8x8xf32> to vector<8x8xf32>
    %229 = tpu.concatenate %222, %224, %226, %228 in 1 : vector<8x8xf32>, vector<8x8xf32>, vector<8x8xf32>, vector<8x8xf32> -> vector<8x32xf32>
    %230 = arith.truncf %229 : vector<8x32xf32> to vector<8x32xbf16>
    %cst_67 = arith.constant dense<0.000000e+00> : vector<8x32xf32>
    %231 = tpu.matmul %230, %170, %cst_67 {dimension_numbers = #tpu.dot_dimension_numbers<[1], [0], [0], [1], [0, 0, 1, 1], [], []>} : vector<8x32xbf16>, vector<32x32xbf16>, vector<8x32xf32> -> vector<8x32xf32>
    %c20 = arith.constant 20 : index
    %c0_68 = arith.constant 0 : index
    %232 = vector.load %arg4[%c20, %c0_68] : memref<32x128xf32, #tpu.memory_space<vmem>>, vector<1x32xf32>
    %233 = vector.broadcast %232 : vector<1x32xf32> to vector<8x32xf32>
    %234 = arith.addf %231, %233 : vector<8x32xf32>
    %235 = arith.addf %168, %234 : vector<8x32xf32>
    %c23 = arith.constant 23 : index
    %c0_69 = arith.constant 0 : index
    %236 = vector.load %arg4[%c23, %c0_69] : memref<32x128xf32, #tpu.memory_space<vmem>>, vector<1x32xf32>
    %c24 = arith.constant 24 : index
    %c0_70 = arith.constant 0 : index
    %237 = vector.load %arg4[%c24, %c0_70] : memref<32x128xf32, #tpu.memory_space<vmem>>, vector<1x32xf32>
    %cst_71 = arith.constant dense<0.000000e+00> : vector<8xf32>
    %238 = vector.multi_reduction <add>, %235, %cst_71 [1] : vector<8x32xf32> to vector<8xf32>
    %239 = vector.shape_cast %238 : vector<8xf32> to vector<8x1xf32>
    %cst_72 = arith.constant 3.200000e+01 : f32
    %240 = vector.broadcast %cst_72 : f32 to vector<8x1xf32>
    %241 = arith.divf %239, %240 : vector<8x1xf32>
    %242 = vector.broadcast %241 : vector<8x1xf32> to vector<8x32xf32>
    %243 = arith.subf %235, %242 : vector<8x32xf32>
    %244 = arith.mulf %243, %243 : vector<8x32xf32>
    %cst_73 = arith.constant dense<0.000000e+00> : vector<8xf32>
    %245 = vector.multi_reduction <add>, %244, %cst_73 [1] : vector<8x32xf32> to vector<8xf32>
    %246 = vector.shape_cast %245 : vector<8xf32> to vector<8x1xf32>
    %cst_74 = arith.constant 3.200000e+01 : f32
    %247 = vector.broadcast %cst_74 : f32 to vector<8x1xf32>
    %248 = arith.divf %246, %247 : vector<8x1xf32>
    %249 = vector.broadcast %241 : vector<8x1xf32> to vector<8x32xf32>
    %250 = arith.subf %235, %249 : vector<8x32xf32>
    %cst_75 = arith.constant 9.99999974E-6 : f32
    %251 = vector.broadcast %cst_75 : f32 to vector<8x1xf32>
    %252 = arith.addf %248, %251 : vector<8x1xf32>
    %253 = math.rsqrt %252 : vector<8x1xf32>
    %254 = vector.broadcast %253 : vector<8x1xf32> to vector<8x32xf32>
    %255 = arith.mulf %250, %254 : vector<8x32xf32>
    %256 = vector.broadcast %236 : vector<1x32xf32> to vector<8x32xf32>
    %257 = arith.mulf %255, %256 : vector<8x32xf32>
    %258 = vector.broadcast %237 : vector<1x32xf32> to vector<8x32xf32>
    %259 = arith.addf %257, %258 : vector<8x32xf32>
    %260 = arith.truncf %259 : vector<8x32xf32> to vector<8x32xbf16>
    %cst_76 = arith.constant dense<0.000000e+00> : vector<8x128xf32>
    %261 = tpu.matmul %260, %171, %cst_76 {dimension_numbers = #tpu.dot_dimension_numbers<[1], [0], [0], [1], [0, 0, 1, 1], [], []>} : vector<8x32xbf16>, vector<32x128xbf16>, vector<8x128xf32> -> vector<8x128xf32>
    %c21 = arith.constant 21 : index
    %c0_77 = arith.constant 0 : index
    %262 = vector.load %arg4[%c21, %c0_77] : memref<32x128xf32, #tpu.memory_space<vmem>>, vector<1x128xf32>
    %263 = vector.broadcast %262 : vector<1x128xf32> to vector<8x128xf32>
    %264 = arith.addf %261, %263 : vector<8x128xf32>
    %cst_78 = arith.constant 0.000000e+00 : f32
    %265 = vector.broadcast %cst_78 : f32 to vector<8x128xf32>
    %266 = arith.maximumf %264, %265 : vector<8x128xf32>
    %267 = arith.truncf %266 : vector<8x128xf32> to vector<8x128xbf16>
    %cst_79 = arith.constant dense<0.000000e+00> : vector<8x32xf32>
    %268 = tpu.matmul %267, %172, %cst_79 {dimension_numbers = #tpu.dot_dimension_numbers<[1], [0], [0], [1], [0, 0, 1, 1], [], []>} : vector<8x128xbf16>, vector<128x32xbf16>, vector<8x32xf32> -> vector<8x32xf32>
    %c22 = arith.constant 22 : index
    %c0_80 = arith.constant 0 : index
    %269 = vector.load %arg4[%c22, %c0_80] : memref<32x128xf32, #tpu.memory_space<vmem>>, vector<1x32xf32>
    %270 = vector.broadcast %269 : vector<1x32xf32> to vector<8x32xf32>
    %271 = arith.addf %268, %270 : vector<8x32xf32>
    %272 = arith.addf %259, %271 : vector<8x32xf32>
    %c25 = arith.constant 25 : index
    %c0_81 = arith.constant 0 : index
    %273 = vector.load %arg4[%c25, %c0_81] : memref<32x128xf32, #tpu.memory_space<vmem>>, vector<1x32xf32>
    %c26 = arith.constant 26 : index
    %c0_82 = arith.constant 0 : index
    %274 = vector.load %arg4[%c26, %c0_82] : memref<32x128xf32, #tpu.memory_space<vmem>>, vector<1x32xf32>
    %cst_83 = arith.constant dense<0.000000e+00> : vector<8xf32>
    %275 = vector.multi_reduction <add>, %272, %cst_83 [1] : vector<8x32xf32> to vector<8xf32>
    %276 = vector.shape_cast %275 : vector<8xf32> to vector<8x1xf32>
    %cst_84 = arith.constant 3.200000e+01 : f32
    %277 = vector.broadcast %cst_84 : f32 to vector<8x1xf32>
    %278 = arith.divf %276, %277 : vector<8x1xf32>
    %279 = vector.broadcast %278 : vector<8x1xf32> to vector<8x32xf32>
    %280 = arith.subf %272, %279 : vector<8x32xf32>
    %281 = arith.mulf %280, %280 : vector<8x32xf32>
    %cst_85 = arith.constant dense<0.000000e+00> : vector<8xf32>
    %282 = vector.multi_reduction <add>, %281, %cst_85 [1] : vector<8x32xf32> to vector<8xf32>
    %283 = vector.shape_cast %282 : vector<8xf32> to vector<8x1xf32>
    %cst_86 = arith.constant 3.200000e+01 : f32
    %284 = vector.broadcast %cst_86 : f32 to vector<8x1xf32>
    %285 = arith.divf %283, %284 : vector<8x1xf32>
    %286 = vector.broadcast %278 : vector<8x1xf32> to vector<8x32xf32>
    %287 = arith.subf %272, %286 : vector<8x32xf32>
    %cst_87 = arith.constant 9.99999974E-6 : f32
    %288 = vector.broadcast %cst_87 : f32 to vector<8x1xf32>
    %289 = arith.addf %285, %288 : vector<8x1xf32>
    %290 = math.rsqrt %289 : vector<8x1xf32>
    %291 = vector.broadcast %290 : vector<8x1xf32> to vector<8x32xf32>
    %292 = arith.mulf %287, %291 : vector<8x32xf32>
    %293 = vector.broadcast %273 : vector<1x32xf32> to vector<8x32xf32>
    %294 = arith.mulf %292, %293 : vector<8x32xf32>
    %295 = vector.broadcast %274 : vector<1x32xf32> to vector<8x32xf32>
    %296 = arith.addf %294, %295 : vector<8x32xf32>
    %c0_88 = arith.constant 0 : index
    %c0_89 = arith.constant 0 : index
    %297 = vector.load %arg5[%c0_88, %c0_89] : memref<8x32xf32, #tpu.memory_space<vmem>>, vector<8x32xf32>
    tpu.vector_store %arg5[%c0_88, %c0_89], %296 {strides = array<i32>} : memref<8x32xf32, #tpu.memory_space<vmem>>, vector<8x32xf32>,
    return
  }
  func.func @transform_0(%arg0: i32) -> (i32, i32) {
    %c0_i32 = arith.constant 0 : i32
    %c0_i32_0 = arith.constant 0 : i32
    return %arg0, %c0_i32 : i32, i32
  }
  func.func @transform_1(%arg0: i32) -> (i32, i32) {
    %c0_i32 = arith.constant 0 : i32
    %c0_i32_0 = arith.constant 0 : i32
    %c0_i32_1 = arith.constant 0 : i32
    return %c0_i32, %c0_i32_0 : i32, i32
  }
  func.func @transform_2(%arg0: i32) -> (i32, i32) {
    %c0_i32 = arith.constant 0 : i32
    %c0_i32_0 = arith.constant 0 : i32
    %c0_i32_1 = arith.constant 0 : i32
    return %c0_i32, %c0_i32_0 : i32, i32
  }
  func.func @transform_3(%arg0: i32) -> (i32, i32) {
    %c0_i32 = arith.constant 0 : i32
    %c0_i32_0 = arith.constant 0 : i32
    %c0_i32_1 = arith.constant 0 : i32
    return %c0_i32, %c0_i32_0 : i32, i32
  }
  func.func @transform_4(%arg0: i32) -> (i32, i32) {
    %c0_i32 = arith.constant 0 : i32
    %c0_i32_0 = arith.constant 0 : i32
    return %arg0, %c0_i32 : i32, i32
  }
}

</mosaic_0001>

<llo_original>
// kernel: meg_encoder_forward.1
$region0: #{meg_encoder_forward.1}
  #allocation0 [shape = 'u32[]', space=smem, size = 0x4, offset = 0x4, fixed_abs, tag = 'smem constant byte address 0x4 - core index']
  #allocation1 [shape = 'u32[144,128]{1,0:T(1,128)}', space=vmem, size = 0x12000, scoped, tag = 'internal scratch']
  #allocation2 [shape = 'f32[16,32]{1,0:T(8,128)}', space=vmem, size = 0x2000, scoped, tag = 'scratch operand']
  %s0 = inlined_call_operand.vmem [shape: f32[32,8], index: 0, kind: input, shape index: {}]
  %s1 = inlined_call_operand.vmem [shape: bf16[128,32], index: 1, kind: input, shape index: {}]
  %s2 = inlined_call_operand.hbm [shape: bf16[320,256], index: 2, kind: input, shape index: {}]
  %s3 = inlined_call_operand.vmem [shape: f32[32,128], index: 3, kind: input, shape index: {}]
  %s4 = inlined_call_operand.hbm [shape: f32[16,32], index: 4, kind: output, shape index: {}]
  %s5 = sld [smem:[#allocation0]]
  $region53: #{meg_encoder_forward.1} parent=0
    _
  %s7 = ssub.s32 1, %s5
  %s8 = scalar_select 0, %s7, %s5
  $region1: #{meg_encoder_forward.1} parent=0
    #allocation3 [shape = 'u8[163840]{0}', space=vmem, size = 0x28000, scoped, tag = 'input window, operand 2, single buffered']
    #allocation4 [shape = 's32[2]{0}', space=sflag, size = 0x8, scoped, tag = 'scoped memory for meg_encoder_forward.1']
    #allocation5 [shape = 's32[2]{0}', space=sflag, size = 0x8, scoped, tag = 'scoped memory for meg_encoder_forward.1']
    #allocation6 [shape = 'u8[8192]{0}', space=vmem, size = 0x2000, scoped, tag = 'output window, operand 0']
    %9 = vsyncpa [#allocation4], 0
    %10 = vsyncpa [#allocation5], 0
    %s11 = scalar_lea.sflag [#allocation5], 1
    %12 = vsyncpa %s11, 0
    loop: start=0, step=1, limit=4
    $region2: #{meg_encoder_forward.1} parent=1 // loop_pre_header
      _
    $region3: #{meg_encoder_forward.1} parent=1 // loop_header
      %s14 = sphi 0, %s18
      %p15 = scmp.ge.s32.totalorder %s14, 4
      %s24 = sphi 0, %s26
      %s27 = sphi 0, %s24
      %s28 = sphi 0, %s27
      %s44 = sphi 0, %s28
      %s48 = sphi 0, %s48
      %s50 = sphi 0, %s48
      %s51 = sphi 0, %s50
      %s65 = sphi 0, %s51
      %s69 = sphi 0, %s69
      %s71 = sphi 0, %s69
      %s72 = sphi 0, %s71
      %s86 = sphi 0, %s72
      %s90 = sphi 0, %s90
      %s92 = sphi 0, %s90
      %s93 = sphi 0, %s92
      %s107 = sphi 0, %s93
      %s113 = sphi 0, %s115
      %s116 = sphi 0, %s113
      %s117 = sphi 0, %s116
      %s133 = sphi 0, %s117
    $region4: #{meg_encoder_forward.1} parent=1 // loop_header_branch
      %17 = sbr.rel (%p15) target = $region8
    $region5: #{meg_encoder_forward.1} parent=1 // loop_body
      %s19 = ssub.s32 %s14, 1
      %s20 = ssub.s32 %s14, 2
      %s21 = sadd.s32 %s14, 1
      %s22 = ssub.s32 %s14, %s21
      %p23 = scmp.eq.s32.totalorder %s22, 0
      %s25 = sadd.s32 %s24, 1
      %s26 = scalar_select %p23, %s24, %s25
      %p29 = pneg %p23
      %p30 = scmp.eq.s32.totalorder %s14, 1
      %p31 = por %p29, %p30
      %p32 = scmp.ne.s32.totalorder %s24, %s27
      %p33 = scmp.eq.s32.totalorder %s14, 0
      %p34 = por %p32, %p33
      %p35 = scmp.ne.s32.totalorder %s24, %s27
      %p36 = scmp.eq.s32.totalorder %s19, 1
      %p37 = por %p35, %p36
      %p38 = scmp.ne.s32.totalorder %s27, %s28
      %p39 = scmp.eq.s32.totalorder %s19, 0
      %p40 = por %p38, %p39
      %p41 = scmp.ne.s32.totalorder %s27, %s28
      %p42 = scmp.eq.s32.totalorder %s20, 1
      %p43 = por %p41, %p42
      %p45 = scmp.ne.s32.totalorder %s28, %s44
      %p46 = scmp.eq.s32.totalorder %s20, 0
      %p47 = por %p45, %p46
      %s49 = sadd.s32 %s48, 1
      %p52 = scmp.eq.s32.totalorder %s14, 1
      %p53 = scmp.ne.s32.totalorder %s48, %s50
      %p54 = scmp.eq.s32.totalorder %s14, 0
      %p55 = por %p53, %p54
      %p56 = scmp.ne.s32.totalorder %s48, %s50
      %p57 = scmp.eq.s32.totalorder %s19, 1
      %p58 = por %p56, %p57
      %p59 = scmp.ne.s32.totalorder %s50, %s51
      %p60 = scmp.eq.s32.totalorder %s19, 0
      %p61 = por %p59, %p60
      %p62 = scmp.ne.s32.totalorder %s50, %s51
      %p63 = scmp.eq.s32.totalorder %s20, 1
      %p64 = por %p62, %p63
      %p66 = scmp.ne.s32.totalorder %s51, %s65
      %p67 = scmp.eq.s32.totalorder %s20, 0
      %p68 = por %p66, %p67
      %s70 = sadd.s32 %s69, 1
      %p73 = scmp.eq.s32.totalorder %s14, 1
      %p74 = scmp.ne.s32.totalorder %s69, %s71
      %p75 = scmp.eq.s32.totalorder %s14, 0
      %p76 = por %p74, %p75
      %p77 = scmp.ne.s32.totalorder %s69, %s71
      %p78 = scmp.eq.s32.totalorder %s19, 1
      %p79 = por %p77, %p78
      %p80 = scmp.ne.s32.totalorder %s71, %s72
      %p81 = scmp.eq.s32.totalorder %s19, 0
      %p82 = por %p80, %p81
      %p83 = scmp.ne.s32.totalorder %s71, %s72
      %p84 = scmp.eq.s32.totalorder %s20, 1
      %p85 = por %p83, %p84
      %p87 = scmp.ne.s32.totalorder %s72, %s86
      %p88 = scmp.eq.s32.totalorder %s20, 0
      %p89 = por %p87, %p88
      %s91 = sadd.s32 %s90, 1
      %p94 = scmp.eq.s32.totalorder %s14, 1
      %p95 = scmp.ne.s32.totalorder %s90, %s92
      %p96 = scmp.eq.s32.totalorder %s14, 0
      %p97 = por %p95, %p96
      %p98 = scmp.ne.s32.totalorder %s90, %s92
      %p99 = scmp.eq.s32.totalorder %s19, 1
      %p100 = por %p98, %p99
      %p101 = scmp.ne.s32.totalorder %s92, %s93
      %p102 = scmp.eq.s32.totalorder %s19, 0
      %p103 = por %p101, %p102
      %p104 = scmp.ne.s32.totalorder %s92, %s93
      %p105 = scmp.eq.s32.totalorder %s20, 1
      %p106 = por %p104, %p105
      %p108 = scmp.ne.s32.totalorder %s93, %s107
      %p109 = scmp.eq.s32.totalorder %s20, 0
      %p110 = por %p108, %p109
      %s111 = ssub.s32 %s14, %s21
      %p112 = scmp.eq.s32.totalorder %s111, 0
      %s114 = sadd.s32 %s113, 1
      %s115 = scalar_select %p112, %s113, %s114
      %p118 = pneg %p112
      %p119 = scmp.eq.s32.totalorder %s14, 1
      %p120 = por %p118, %p119
      %p121 = scmp.ne.s32.totalorder %s113, %s116
      %p122 = scmp.eq.s32.totalorder %s14, 0
      %p123 = por %p121, %p122
      %p124 = scmp.ne.s32.totalorder %s113, %s116
      %p125 = scmp.eq.s32.totalorder %s19, 1
      %p126 = por %p124, %p125
      %p127 = scmp.ne.s32.totalorder %s116, %s117
      %p128 = scmp.eq.s32.totalorder %s19, 0
      %p129 = por %p127, %p128
      %p130 = scmp.ne.s32.totalorder %s116, %s117
      %p131 = scmp.eq.s32.totalorder %s20, 1
      %p132 = por %p130, %p131
      %p134 = scmp.ne.s32.totalorder %s117, %s133
      %p135 = scmp.eq.s32.totalorder %s20, 0
      %p136 = por %p134, %p135
      %p137 = scmp.le.s32.totalorder 1, %s14
      %p138 = scmp.lt.s32.totalorder %s14, 3
      %p139 = pnand %p137, %p138
      %p140 = pneg %p139
      // Predicated region
      $region9: #{meg_encoder_forward.1} parent=5 // pred_check
        _
      $region10: #{meg_encoder_forward.1} parent=5 // pred_check_branch
        %142 = sbr.rel (%p139) target = $region12
      $region11: #{meg_encoder_forward.1} parent=5 // pred_region
        %s143 = ssub.s32 %s14, 1
        // Predicated region
        $region13: #{meg_encoder_forward.1} parent=11 // pred_check
          %p144 = pneg %p61
        $region14: #{meg_encoder_forward.1} parent=11 // pred_check_branch
          %146 = sbr.rel (%p144) target = $region16
        $region15: #{meg_encoder_forward.1} parent=11 // pred_region
          _
        $region16: #{meg_encoder_forward.1} parent=11 // pred_fallthru
          _
        // Predicated region
        $region17: #{meg_encoder_forward.1} parent=11 // pred_check
          %p147 = pneg %p82
        $region18: #{meg_encoder_forward.1} parent=11 // pred_check_branch
          %149 = sbr.rel (%p147) target = $region20
        $region19: #{meg_encoder_forward.1} parent=11 // pred_region
          %s151 = ssub.s32 5120, 5120
          %152 = vsyncadd [#allocation4], %s151
          %s153 = sshll.u32 [#allocation3], 4
          %s154 = int_to_ptr.vmem [resolvable:$true] %s153
          %159 = dma.hbm_to_vmem [thread:$0]  %s2, 5120, %s154, [#allocation4], 128, 128, 8
        $region20: #{meg_encoder_forward.1} parent=11 // pred_fallthru
          _
        // Predicated region
        $region21: #{meg_encoder_forward.1} parent=11 // pred_check
          %p160 = pneg %p103
        $region22: #{meg_encoder_forward.1} parent=11 // pred_check_branch
          %162 = sbr.rel (%p160) target = $region24
        $region23: #{meg_encoder_forward.1} parent=11 // pred_region
          _
        $region24: #{meg_encoder_forward.1} parent=11 // pred_fallthru
          _
      $region12: #{meg_encoder_forward.1} parent=5 // pred_fallthru
        _
      %p163 = scmp.lt.s32.totalorder %s14, 2
      // Predicated region
      $region25: #{meg_encoder_forward.1} parent=5 // pred_check
        %p164 = pneg %p163
      $region26: #{meg_encoder_forward.1} parent=5 // pred_check_branch
        %166 = sbr.rel (%p164) target = $region28
      $region27: #{meg_encoder_forward.1} parent=5 // pred_region
        // Predicated region
        $region29: #{meg_encoder_forward.1} parent=27 // pred_check
          %p167 = pneg %p34
        $region30: #{meg_encoder_forward.1} parent=27 // pred_check_branch
          %169 = sbr.rel (%p167) target = $region32
        $region31: #{meg_encoder_forward.1} parent=27 // pred_region
          %s170 = smul.u32 2, %s14
          %p171 = scmp.lt.s32.totalorder %s170, 3
          %s172 = scalar_select %p171, %s170, 3
          %s173 = smul.addr %s172, 8
          %s174 = scalar_lea.vmem %s0, %s173
          %s175 = smul.u32 2, %s14
        $region32: #{meg_encoder_forward.1} parent=27 // pred_fallthru
          _
      $region28: #{meg_encoder_forward.1} parent=5 // pred_fallthru
        _
      %p176 = scmp.le.s32.totalorder 1, %s14
      %p177 = scmp.lt.s32.totalorder %s14, 3
      %p178 = pnand %p176, %p177
      %p179 = pneg %p178
      // Predicated region
      $region33: #{meg_encoder_forward.1} parent=5 // pred_check
        _
      $region34: #{meg_encoder_forward.1} parent=5 // pred_check_branch
        %181 = sbr.rel (%p178) target = $region36
      $region35: #{meg_encoder_forward.1} parent=5 // pred_region
        %s182 = ssub.s32 %s14, 1
        // Predicated region
        $region37: #{meg_encoder_forward.1} parent=35 // pred_check
          %p183 = pneg %p82
        $region38: #{meg_encoder_forward.1} parent=35 // pred_check_branch
          %185 = sbr.rel (%p183) target = $region40
        $region39: #{meg_encoder_forward.1} parent=35 // pred_region
          %186 = dma.done [#allocation4], 5120
        $region40: #{meg_encoder_forward.1} parent=35 // pred_fallthru
          _
        %s187 = smul.u32 2, %s19
        %p188 = scmp.lt.s32.totalorder %s187, 3
        %s189 = scalar_select %p188, %s187, 3
        %s190 = smul.addr %s189, 8
        %s191 = scalar_lea.vmem %s0, %s190
        %p192 = pneg %p40
        %p193 = pneg %p37
        %p194 = pneg %p61
        %p195 = pneg %p58
        %p196 = pneg %p82
        %p197 = pneg %p79
        %p198 = pneg %p103
        %p199 = pneg %p100
        %p200 = pneg %p129
        %p201 = pneg %p126
        %s202 = sand.u32 %s116, 1
        %s203 = scalar_lea.sflag [#allocation5], %s202
        %s204 = sand.u32 %s116, 1
        %s205 = smul.addr %s204, 8
        %s206 = scalar_lea.vmem [#allocation6], %s205
        %s207 = smul.u32 2, %s19
        %p208 = scmp.lt.s32.totalorder %s207, 3
        %s209 = scalar_select %p208, %s207, 3
        %s210 = smul.addr %s209, 8
        %s211 = scalar_lea.vmem %s0, %s210
        %s212 = smul.u32 2, %s19
        %v214 = vld [vmem:[%s211] sm:$0xff]
        %v215 = vld [vmem:[%s211 + $0x8] sm:$0xff]
        %v216 = vld [vmem:[%s1] sm:$0xf]
        %v217 = vld [vmem:[%s1 + $0x4] sm:$0xf]
        %v218 = vld [vmem:[%s1 + $0x8] sm:$0xf]
        %v219 = vld [vmem:[%s1 + $0xc] sm:$0xf]
        %v220 = vld [vmem:[%s1 + $0x10] sm:$0xf]
        %vm223 = vcmask 1041408
        %v224 = vrot.slane %v214, 6
        %v225 = vrot.slane %v215, 6
        %v226 = vsel %vm223, %v224, %v225
        %v230 = vsel %vm223, 0.0, %v224
        %v231 = vsel %vm223, %v225, 0.0
        %vm234 = vcmask 1046528
        %v235 = vrot.slane %v230, 1
        %v236 = vrot.slane %v226, 1
        %v237 = vsel %vm234, %v235, %v236
        %v238 = vrot.slane %v231, 1
        %v239 = vsel %vm234, %v236, %v238
        %240 = vrot.lane.b32.xlu0 %v237, 8
        %v241 = vpop.permute.xlu0 %240
        %242 = vrot.lane.b32.xlu0 %v239, 8
        %v243 = vpop.permute.xlu0 %242
        %vm246 = vcmask 1045504
        %v247 = vrot.slane %v230, 2
        %v248 = vrot.slane %v226, 2
        %v249 = vsel %vm246, %v247, %v248
        %v250 = vrot.slane %v231, 2
        %v251 = vsel %vm246, %v248, %v250
        %252 = vrot.lane.b32.xlu0 %v249, 16
        %v253 = vpop.permute.xlu0 %252
        %254 = vrot.lane.b32.xlu0 %v251, 16
        %v255 = vpop.permute.xlu0 %254
        %vm258 = vcmask 1044480
        %v259 = vrot.slane %v230, 3
        %v260 = vrot.slane %v226, 3
        %v261 = vsel %vm258, %v259, %v260
        %v262 = vrot.slane %v231, 3
        %v263 = vsel %vm258, %v260, %v262
        %264 = vrot.lane.b32.xlu0 %v261, 24
        %v265 = vpop.permute.xlu0 %264
        %266 = vrot.lane.b32.xlu0 %v263, 24
        %v267 = vpop.permute.xlu0 %266
        %vm270 = vcmask 1043456
        %v271 = vrot.slane %v230, 4
        %v272 = vrot.slane %v226, 4
        %v273 = vsel %vm270, %v271, %v272
        %v274 = vrot.slane %v231, 4
        %v275 = vsel %vm270, %v272, %v274
        %276 = vrot.lane.b32.xlu0 %v273, 32
        %v277 = vpop.permute.xlu0 %276
        %278 = vrot.lane.b32.xlu0 %v275, 32
        %v279 = vpop.permute.xlu0 %278
        %vm282 = vcmask 64512
        %v283 = vsel %vm282, %v230, %v241
        %v284 = vsel %vm282, %v226, %v243
        %vm285 = vcmask 130048
        %v286 = vsel %vm285, %v283, %v253
        %v287 = vsel %vm285, %v284, %v255
        %vm288 = vcmask 195584
        %v289 = vsel %vm288, %v286, %v265
        %v290 = vsel %vm288, %v287, %v267
        %vm291 = vcmask 261120
        %v292 = vsel %vm291, %v289, %v277
        %v293 = vsel %vm291, %v290, %v279
        %v294 = vpack.c.bf16 %v293, %v292
        %v295 = vld [vmem:[%s3] sm:$0x1]
        %v296 = vlaneseq
        %v297 = vshrl.u32 %v296, 7
        %v298 = vsub.s32 0, %v297
        %v299 = vrot.slane %v295, %v298
        %v305 = vunpack.c.l.b16 %v216
        %v306 = vunpack.c.l.b16 %v217
        %v307 = vunpack.c.l.b16 %v218
        %v308 = vunpack.c.l.b16 %v219
        %v309 = vunpack.c.l.b16 %v220
        %v310 = vpack.c.b16 %v306, %v305
        %v311 = vpack.c.b16 %v308, %v307
        %v312 = vpack.c.b16 %v309, %v309
        %vm315 = vcmask 326656
        %v317 = vsel %vm315, %v294, 0
        %v320 = vsel %vm270, %v312, 0
        %322 = vmatprep.subr.bf16.mxu0 0
        %323 = vmatpush1.bf16.msra.mxu0 %v310
        %324 = vmatprep.subr.bf16.mxu0 0
        %325 = vmatpush1.bf16.msra.mxu0 %v311
        %326 = vmatprep.subr.bf16.mxu0 0
        %327 = vmatpush1.bf16.msra.mxu0 %v320
        %328 = vmatprep.subr.bf16.mxu0 0
        %329 = vmatpush1.bf16.msra.mxu0 0
        %330 = vmatprep.subr.bf16.mxu0 0
        %331 = vmatpush1.bf16.msra.mxu0 0
        %332 = vmatprep.subr.bf16.mxu0 0
        %333 = vmatpush1.bf16.msra.mxu0 0
        %334 = vmatprep.subr.bf16.mxu0 0
        %335 = vmatpush1.bf16.msra.mxu0 0
        %336 = vmatprep.subr.bf16.mxu0 0
        %337 = vmatpush1.bf16.msra.mxu0 0
        %338 = vmatprep.subr.bf16.mxu0 0
        %339 = vmatpush1.bf16.msra.mxu0 0
        %340 = vmatprep.subr.bf16.mxu0 0
        %341 = vmatpush1.bf16.msra.mxu0 0
        %342 = vmatprep.subr.bf16.mxu0 0
        %343 = vmatpush1.bf16.msra.mxu0 0
        %344 = vmatprep.subr.bf16.mxu0 0
        %345 = vmatpush1.bf16.msra.mxu0 0
        %346 = vmatprep.subr.bf16.mxu0 0
        %347 = vmatpush1.bf16.msra.mxu0 0
        %348 = vmatprep.subr.bf16.mxu0 0
        %349 = vmatpush1.bf16.msra.mxu0 0
        %350 = vmatprep.subr.bf16.mxu0 0
        %351 = vmatpush1.bf16.msra.mxu0 0
        %352 = vmatprep.subr.bf16.mxu0 0
        %353 = vmatpush1.bf16.msra.mxu0 0
        %354 = vmatprep.mubr.bf16.mxu0 0
        %355 = vmatmul.mubr.bf16.gmra.mrb[0].mxu0 %v317
        %v356 = vpop.f32.mrb[0].mxu0
        %v357 = vadd.f32 %v299, %v356
        %v358 = vpop.f32.mrb[0].mxu0
        %v359 = vpop.f32.mrb[0].mxu0
        %v360 = vadd.f32 %v299, %v359
        %v361 = vpop.f32.mrb[0].mxu0
        %362 = vdwg.mxu0
        %v363 = vmax.f32 %v357, 0.0
        %v364 = vmax.f32 %v360, 0.0
        %v365 = vld [vmem:[%s1 + $0x18] sm:$0xf]
        %v366 = vld [vmem:[%s1 + $0x1c] sm:$0xf]
        %v367 = vld [vmem:[%s1 + $0x20] sm:$0xf]
        %v368 = vld [vmem:[%s1 + $0x24] sm:$0xf]
        %v369 = vld [vmem:[%s1 + $0x28] sm:$0xf]
        %v370 = vld [vmem:[%s1 + $0x2c] sm:$0xf]
        %vm373 = vcmask 1040384
        %v374 = vrot.slane %v363, 7
        %v375 = vrot.slane %v364, 7
        %v376 = vsel %vm373, %v374, %v375
        %v380 = vsel %vm373, 0.0, %v374
        %v381 = vsel %vm373, %v375, 0.0
        %v384 = vrot.slane %v380, 1
        %v385 = vrot.slane %v376, 1
        %v386 = vsel %vm234, %v384, %v385
        %v387 = vrot.slane %v381, 1
        %v388 = vsel %vm234, %v385, %v387
        %389 = vrot.lane.b32.xlu0 %v386, 16
        %v390 = vpop.permute.xlu0 %389
        %391 = vrot.lane.b32.xlu0 %v388, 16
        %v392 = vpop.permute.xlu0 %391
        %v395 = vrot.slane %v380, 2
        %v396 = vrot.slane %v376, 2
        %v397 = vsel %vm246, %v395, %v396
        %v398 = vrot.slane %v381, 2
        %v399 = vsel %vm246, %v396, %v398
        %400 = vrot.lane.b32.xlu0 %v397, 32
        %v401 = vpop.permute.xlu0 %400
        %402 = vrot.lane.b32.xlu0 %v399, 32
        %v403 = vpop.permute.xlu0 %402
        %v406 = vsel %vm285, %v380, %v390
        %v407 = vsel %vm285, %v376, %v392
        %v408 = vsel %vm291, %v406, %v401
        %v409 = vsel %vm291, %v407, %v403
        %v410 = vpack.c.bf16 %v409, %v408
        %v411 = vld [vmem:[%s3 + $0x1] sm:$0x1]
        %v412 = vlaneseq
        %v413 = vshrl.u32 %v412, 7
        %v414 = vsub.s32 0, %v413
        %v415 = vrot.slane %v411, %v414
        %v422 = vunpack.c.l.b16 %v365
        %v423 = vunpack.c.l.b16 %v366
        %v424 = vunpack.c.l.b16 %v367
        %v425 = vunpack.c.l.b16 %v368
        %v426 = vunpack.c.l.b16 %v369
        %v427 = vunpack.c.l.b16 %v370
        %v428 = vpack.c.b16 %v423, %v422
        %v429 = vpack.c.b16 %v425, %v424
        %v430 = vpack.c.b16 %v427, %v426
        %vm434 = vcmask 392192
        %v436 = vsel %vm434, %v410, 0
        %438 = vmatprep.subr.bf16.mxu0 0
        %439 = vmatpush1.bf16.msra.mxu0 %v428
        %440 = vmatprep.subr.bf16.mxu0 0
        %441 = vmatpush1.bf16.msra.mxu0 %v429
        %442 = vmatprep.subr.bf16.mxu0 0
        %443 = vmatpush1.bf16.msra.mxu0 %v430
        %444 = vmatprep.subr.bf16.mxu0 0
        %445 = vmatpush1.bf16.msra.mxu0 0
        %446 = vmatprep.subr.bf16.mxu0 0
        %447 = vmatpush1.bf16.msra.mxu0 0
        %448 = vmatprep.subr.bf16.mxu0 0
        %449 = vmatpush1.bf16.msra.mxu0 0
        %450 = vmatprep.subr.bf16.mxu0 0
        %451 = vmatpush1.bf16.msra.mxu0 0
        %452 = vmatprep.subr.bf16.mxu0 0
        %453 = vmatpush1.bf16.msra.mxu0 0
        %454 = vmatprep.subr.bf16.mxu0 0
        %455 = vmatpush1.bf16.msra.mxu0 0
        %456 = vmatprep.subr.bf16.mxu0 0
        %457 = vmatpush1.bf16.msra.mxu0 0
        %458 = vmatprep.subr.bf16.mxu0 0
        %459 = vmatpush1.bf16.msra.mxu0 0
        %460 = vmatprep.subr.bf16.mxu0 0
        %461 = vmatpush1.bf16.msra.mxu0 0
        %462 = vmatprep.subr.bf16.mxu0 0
        %463 = vmatpush1.bf16.msra.mxu0 0
        %464 = vmatprep.subr.bf16.mxu0 0
        %465 = vmatpush1.bf16.msra.mxu0 0
        %466 = vmatprep.subr.bf16.mxu0 0
        %467 = vmatpush1.bf16.msra.mxu0 0
        %468 = vmatprep.subr.bf16.mxu0 0
        %469 = vmatpush1.bf16.msra.mxu0 0
        %470 = vmatprep.mubr.bf16.mxu0 0
        %471 = vmatmul.mubr.bf16.gmra.mrb[0].mxu0 %v436
        %v472 = vpop.f32.mrb[0].mxu0
        %v473 = vadd.f32 %v415, %v472
        %v474 = vpop.f32.mrb[0].mxu0
        %v475 = vpop.f32.mrb[0].mxu0
        %v476 = vadd.f32 %v415, %v475
        %v477 = vpop.f32.mrb[0].mxu0
        %478 = vdwg.mxu0
        %v479 = vmax.f32 %v473, 0.0
        %v480 = vmax.f32 %v476, 0.0
        %481 = vst.msk [vmem:[#allocation2] sm:$0xff] %vm291, %v479
        %482 = vst.msk [vmem:[#allocation2 + $0x8] sm:$0xff] %vm291, %v480
        %v483 = vld [vmem:[#allocation2] ss:$2 sm:$0xff]
        %v484 = vld [vmem:[%s1 + $0x30] sm:$0xf]
        %v485 = vld [vmem:[%s1 + $0x34] sm:$0xf]
        %v486 = vld [vmem:[%s1 + $0x38] sm:$0xf]
        %v487 = vld [vmem:[%s1 + $0x3c] sm:$0xf]
        %v488 = vpack.c.bf16 %v483, %v483
        %v489 = vld [vmem:[%s3 + $0x2] sm:$0x1]
        %v490 = vlaneseq
        %v491 = vshrl.u32 %v490, 7
        %v492 = vsub.s32 0, %v491
        %v493 = vrot.slane %v489, %v492
        %v498 = vunpack.c.l.b16 %v484
        %v499 = vunpack.c.l.b16 %v485
        %v500 = vunpack.c.l.b16 %v486
        %v501 = vunpack.c.l.b16 %v487
        %v502 = vpack.c.b16 %v499, %v498
        %v503 = vpack.c.b16 %v501, %v500
        %v507 = vsel %vm291, %v488, 0
        %509 = vmatprep.subr.bf16.mxu0 0
        %510 = vmatpush1.bf16.msra.mxu0 %v502
        %511 = vmatprep.subr.bf16.mxu0 0
        %512 = vmatpush1.bf16.msra.mxu0 %v503
        %513 = vmatprep.subr.bf16.mxu0 0
        %514 = vmatpush1.bf16.msra.mxu0 0
        %515 = vmatprep.subr.bf16.mxu0 0
        %516 = vmatpush1.bf16.msra.mxu0 0
        %517 = vmatprep.subr.bf16.mxu0 0
        %518 = vmatpush1.bf16.msra.mxu0 0
        %519 = vmatprep.subr.bf16.mxu0 0
        %520 = vmatpush1.bf16.msra.mxu0 0
        %521 = vmatprep.subr.bf16.mxu0 0
        %522 = vmatpush1.bf16.msra.mxu0 0
        %523 = vmatprep.subr.bf16.mxu0 0
        %524 = vmatpush1.bf16.msra.mxu0 0
        %525 = vmatprep.subr.bf16.mxu0 0
        %526 = vmatpush1.bf16.msra.mxu0 0
        %527 = vmatprep.subr.bf16.mxu0 0
        %528 = vmatpush1.bf16.msra.mxu0 0
        %529 = vmatprep.subr.bf16.mxu0 0
        %530 = vmatpush1.bf16.msra.mxu0 0
        %531 = vmatprep.subr.bf16.mxu0 0
        %532 = vmatpush1.bf16.msra.mxu0 0
        %533 = vmatprep.subr.bf16.mxu0 0
        %534 = vmatpush1.bf16.msra.mxu0 0
        %535 = vmatprep.subr.bf16.mxu0 0
        %536 = vmatpush1.bf16.msra.mxu0 0
        %537 = vmatprep.subr.bf16.mxu0 0
        %538 = vmatpush1.bf16.msra.mxu0 0
        %539 = vmatprep.subr.bf16.mxu0 0
        %540 = vmatpush1.bf16.msra.mxu0 0
        %541 = vmatprep.mubr.bf16.mxu0 0
        %542 = vmatmul.mubr.bf16.gmra.mrb[0].mxu0 %v507
        %v543 = vpop.f32.mrb[0].mxu0
        %v544 = vadd.f32 %v493, %v543
        %v545 = vpop.f32.mrb[0].mxu0
        %v546 = vpop.f32.mrb[0].mxu0
        %v547 = vpop.f32.mrb[0].mxu0
        %548 = vdwg.mxu0
        %v549 = vld [vmem:[%s3 + $0x3] sm:$0xff]
        %v550 = vadd.f32 %v544, %v549
        %v551 = vld [vmem:[#allocation3] sm:$0xf]
        %v552 = vld [vmem:[#allocation3 + $0x8] sm:$0xf]
        %v553 = vld [vmem:[#allocation3 + $0x10] sm:$0xf]
        %v554 = vld [vmem:[#allocation3 + $0x18] sm:$0xf]
        %v555 = vld [vmem:[#allocation3 + $0x4] sm:$0xf]
        %v556 = vld [vmem:[#allocation3 + $0xc] sm:$0xf]
        %v557 = vld [vmem:[#allocation3 + $0x14] sm:$0xf]
        %v558 = vld [vmem:[#allocation3 + $0x1c] sm:$0xf]
        %v559 = vld [vmem:[#allocation3 + $0x20] sm:$0xf]
        %v560 = vld [vmem:[#allocation3 + $0x28] sm:$0xf]
        %v561 = vld [vmem:[#allocation3 + $0x30] sm:$0xf]
        %v562 = vld [vmem:[#allocation3 + $0x38] sm:$0xf]
        %v563 = vld [vmem:[#allocation3 + $0x40] sm:$0xf]
        %v564 = vld [vmem:[#allocation3 + $0x48] sm:$0xf]
        %v565 = vld [vmem:[#allocation3 + $0x50] sm:$0xf]
        %v566 = vld [vmem:[#allocation3 + $0x58] sm:$0xf]
        %v567 = vld [vmem:[#allocation3 + $0x60] sm:$0xf]
        %v568 = vld [vmem:[#allocation3 + $0x68] sm:$0xf]
        %v569 = vld [vmem:[#allocation3 + $0x70] sm:$0xf]
        %v570 = vld [vmem:[#allocation3 + $0x78] sm:$0xf]
        %v571 = vld [vmem:[#allocation3 + $0x80] sm:$0xf]
        %v572 = vld [vmem:[#allocation3 + $0x88] sm:$0xf]
        %v573 = vld [vmem:[#allocation3 + $0x90] sm:$0xf]
        %v574 = vld [vmem:[#allocation3 + $0x98] sm:$0xf]
        %v575 = vpack.c.bf16 %v550, %v550
        %v576 = vld [vmem:[%s3 + $0xb] sm:$0x1]
        %v577 = vlaneseq
        %v578 = vshrl.u32 %v577, 7
        %v579 = vsub.s32 0, %v578
        %v580 = vrot.slane %v576, %v579
        %v585 = vunpack.c.l.b16 %v551
        %v586 = vunpack.c.l.b16 %v552
        %v587 = vunpack.c.l.b16 %v553
        %v588 = vunpack.c.l.b16 %v554
        %v589 = vpack.c.b16 %v586, %v585
        %v590 = vpack.c.b16 %v588, %v587
        %v594 = vsel %vm291, %v575, 0
        %596 = vmatprep.subr.bf16.mxu0 0
        %597 = vmatpush1.bf16.msra.mxu0 %v589
        %598 = vmatprep.subr.bf16.mxu0 0
        %599 = vmatpush1.bf16.msra.mxu0 %v590
        %600 = vmatprep.subr.bf16.mxu0 0
        %601 = vmatpush1.bf16.msra.mxu0 0
        %602 = vmatprep.subr.bf16.mxu0 0
        %603 = vmatpush1.bf16.msra.mxu0 0
        %604 = vmatprep.subr.bf16.mxu0 0
        %605 = vmatpush1.bf16.msra.mxu0 0
        %606 = vmatprep.subr.bf16.mxu0 0
        %607 = vmatpush1.bf16.msra.mxu0 0
        %608 = vmatprep.subr.bf16.mxu0 0
        %609 = vmatpush1.bf16.msra.mxu0 0
        %610 = vmatprep.subr.bf16.mxu0 0
        %611 = vmatpush1.bf16.msra.mxu0 0
        %612 = vmatprep.subr.bf16.mxu0 0
        %613 = vmatpush1.bf16.msra.mxu0 0
        %614 = vmatprep.subr.bf16.mxu0 0
        %615 = vmatpush1.bf16.msra.mxu0 0
        %616 = vmatprep.subr.bf16.mxu0 0
        %617 = vmatpush1.bf16.msra.mxu0 0
        %618 = vmatprep.subr.bf16.mxu0 0
        %619 = vmatpush1.bf16.msra.mxu0 0
        %620 = vmatprep.subr.bf16.mxu0 0
        %621 = vmatpush1.bf16.msra.mxu0 0
        %622 = vmatprep.subr.bf16.mxu0 0
        %623 = vmatpush1.bf16.msra.mxu0 0
        %624 = vmatprep.subr.bf16.mxu0 0
        %625 = vmatpush1.bf16.msra.mxu0 0
        %626 = vmatprep.subr.bf16.mxu0 0
        %627 = vmatpush1.bf16.msra.mxu0 0
        %628 = vmatprep.mubr.bf16.mxu0 0
        %629 = vmatmul.mubr.bf16.gmra.mrb[0].mxu0 %v594
        %v630 = vpop.f32.mrb[0].mxu0
        %v631 = vadd.f32 %v580, %v630
        %v632 = vpop.f32.mrb[0].mxu0
        %v633 = vpop.f32.mrb[0].mxu0
        %v634 = vpop.f32.mrb[0].mxu0
        %635 = vdwg.mxu0
        %v636 = vpack.c.bf16 %v631, %v631
        %638 = vrot.lane.b32.xlu0 %v636, 120
        %v639 = vpop.permute.xlu0 %638
        %640 = vrot.lane.b32.xlu0 %v636, 112
        %v641 = vpop.permute.xlu0 %640
        %642 = vrot.lane.b32.xlu0 %v636, 104
        %v643 = vpop.permute.xlu0 %642
        %644 = vrot.lane.b32.xlu0 %v636, 96
        %v645 = vpop.permute.xlu0 %644
        %v647 = vsel %vm282, %v636, 0
        %v650 = vsel %vm282, %v645, 0
        %652 = vmatprep.subr.bf16.mxu0 0
        %653 = vmatpush1.bf16.xpose.msra.mxu0 %v650
        %654 = vmatprep.subr.bf16.mxu0 0
        %655 = vmatpush1.bf16.xpose.msra.mxu0 0
        %656 = vmatprep.subr.bf16.mxu0 0
        %657 = vmatpush1.bf16.xpose.msra.mxu0 0
        %658 = vmatprep.subr.bf16.mxu0 0
        %659 = vmatpush1.bf16.xpose.msra.mxu0 0
        %660 = vmatprep.subr.bf16.mxu0 0
        %661 = vmatpush1.bf16.xpose.msra.mxu0 0
        %662 = vmatprep.subr.bf16.mxu0 0
        %663 = vmatpush1.bf16.xpose.msra.mxu0 0
        %664 = vmatprep.subr.bf16.mxu0 0
        %665 = vmatpush1.bf16.xpose.msra.mxu0 0
        %666 = vmatprep.subr.bf16.mxu0 0
        %667 = vmatpush1.bf16.xpose.msra.mxu0 0
        %668 = vmatprep.subr.bf16.mxu0 0
        %669 = vmatpush1.bf16.xpose.msra.mxu0 0
        %670 = vmatprep.subr.bf16.mxu0 0
        %671 = vmatpush1.bf16.xpose.msra.mxu0 0
        %672 = vmatprep.subr.bf16.mxu0 0
        %673 = vmatpush1.bf16.xpose.msra.mxu0 0
        %674 = vmatprep.subr.bf16.mxu0 0
        %675 = vmatpush1.bf16.xpose.msra.mxu0 0
        %676 = vmatprep.subr.bf16.mxu0 0
        %677 = vmatpush1.bf16.xpose.msra.mxu0 0
        %678 = vmatprep.subr.bf16.mxu0 0
        %679 = vmatpush1.bf16.xpose.msra.mxu0 0
        %680 = vmatprep.subr.bf16.mxu0 0
        %681 = vmatpush1.bf16.xpose.msra.mxu0 0
        %682 = vmatprep.subr.bf16.mxu0 0
        %683 = vmatpush1.bf16.xpose.msra.mxu0 0
        %684 = vmatprep.mubr.bf16.mxu0 0
        %685 = vmatmul.mubr.bf16.gmra.mrb[0].mxu0 %v647
        %v686 = vpop.f32.mrb[0].mxu0
        %v687 = vadd.f32 0.0, %v686
        %v688 = vpop.f32.mrb[0].mxu0
        %v689 = vpop.f32.mrb[0].mxu0
        %v690 = vpop.f32.mrb[0].mxu0
        %691 = vdwg.mxu0
        %692 = vrot.lane.b32.xlu0 %v639, 96
        %v693 = vpop.permute.xlu0 %692
        %v695 = vsel %vm282, %v639, 0
        %v698 = vsel %vm282, %v693, 0
        %700 = vmatprep.subr.bf16.mxu0 0
        %701 = vmatpush1.bf16.xpose.msra.mxu0 %v698
        %702 = vmatprep.subr.bf16.mxu0 0
        %703 = vmatpush1.bf16.xpose.msra.mxu0 0
        %704 = vmatprep.subr.bf16.mxu0 0
        %705 = vmatpush1.bf16.xpose.msra.mxu0 0
        %706 = vmatprep.subr.bf16.mxu0 0
        %707 = vmatpush1.bf16.xpose.msra.mxu0 0
        %708 = vmatprep.subr.bf16.mxu0 0
        %709 = vmatpush1.bf16.xpose.msra.mxu0 0
        %710 = vmatprep.subr.bf16.mxu0 0
        %711 = vmatpush1.bf16.xpose.msra.mxu0 0
        %712 = vmatprep.subr.bf16.mxu0 0
        %713 = vmatpush1.bf16.xpose.msra.mxu0 0
        %714 = vmatprep.subr.bf16.mxu0 0
        %715 = vmatpush1.bf16.xpose.msra.mxu0 0
        %716 = vmatprep.subr.bf16.mxu0 0
        %717 = vmatpush1.bf16.xpose.msra.mxu0 0
        %718 = vmatprep.subr.bf16.mxu0 0
        %719 = vmatpush1.bf16.xpose.msra.mxu0 0
        %720 = vmatprep.subr.bf16.mxu0 0
        %721 = vmatpush1.bf16.xpose.msra.mxu0 0
        %722 = vmatprep.subr.bf16.mxu0 0
        %723 = vmatpush1.bf16.xpose.msra.mxu0 0
        %724 = vmatprep.subr.bf16.mxu0 0
        %725 = vmatpush1.bf16.xpose.msra.mxu0 0
        %726 = vmatprep.subr.bf16.mxu0 0
        %727 = vmatpush1.bf16.xpose.msra.mxu0 0
        %728 = vmatprep.subr.bf16.mxu0 0
        %729 = vmatpush1.bf16.xpose.msra.mxu0 0
        %730 = vmatprep.subr.bf16.mxu0 0
        %731 = vmatpush1.bf16.xpose.msra.mxu0 0
        %732 = vmatprep.mubr.bf16.mxu0 0
        %733 = vmatmul.mubr.bf16.gmra.mrb[0].mxu0 %v695
        %v734 = vpop.f32.mrb[0].mxu0
        %v735 = vadd.f32 0.0, %v734
        %v736 = vpop.f32.mrb[0].mxu0
        %v737 = vpop.f32.mrb[0].mxu0
        %v738 = vpop.f32.mrb[0].mxu0
        %739 = vdwg.mxu0
        %740 = vrot.lane.b32.xlu0 %v641, 96
        %v741 = vpop.permute.xlu0 %740
        %v743 = vsel %vm282, %v641, 0
        %v746 = vsel %vm282, %v741, 0
        %748 = vmatprep.subr.bf16.mxu0 0
        %749 = vmatpush1.bf16.xpose.msra.mxu0 %v746
        %750 = vmatprep.subr.bf16.mxu0 0
        %751 = vmatpush1.bf16.xpose.msra.mxu0 0
        %752 = vmatprep.subr.bf16.mxu0 0
        %753 = vmatpush1.bf16.xpose.msra.mxu0 0
        %754 = vmatprep.subr.bf16.mxu0 0
        %755 = vmatpush1.bf16.xpose.msra.mxu0 0
        %756 = vmatprep.subr.bf16.mxu0 0
        %757 = vmatpush1.bf16.xpose.msra.mxu0 0
        %758 = vmatprep.subr.bf16.mxu0 0
        %759 = vmatpush1.bf16.xpose.msra.mxu0 0
        %760 = vmatprep.subr.bf16.mxu0 0
        %761 = vmatpush1.bf16.xpose.msra.mxu0 0
        %762 = vmatprep.subr.bf16.mxu0 0
        %763 = vmatpush1.bf16.xpose.msra.mxu0 0
        %764 = vmatprep.subr.bf16.mxu0 0
        %765 = vmatpush1.bf16.xpose.msra.mxu0 0
        %766 = vmatprep.subr.bf16.mxu0 0
        %767 = vmatpush1.bf16.xpose.msra.mxu0 0
        %768 = vmatprep.subr.bf16.mxu0 0
        %769 = vmatpush1.bf16.xpose.msra.mxu0 0
        %770 = vmatprep.subr.bf16.mxu0 0
        %771 = vmatpush1.bf16.xpose.msra.mxu0 0
        %772 = vmatprep.subr.bf16.mxu0 0
        %773 = vmatpush1.bf16.xpose.msra.mxu0 0
        %774 = vmatprep.subr.bf16.mxu0 0
        %775 = vmatpush1.bf16.xpose.msra.mxu0 0
        %776 = vmatprep.subr.bf16.mxu0 0
        %777 = vmatpush1.bf16.xpose.msra.mxu0 0
        %778 = vmatprep.subr.bf16.mxu0 0
        %779 = vmatpush1.bf16.xpose.msra.mxu0 0
        %780 = vmatprep.mubr.bf16.mxu0 0
        %781 = vmatmul.mubr.bf16.gmra.mrb[0].mxu0 %v743
        %v782 = vpop.f32.mrb[0].mxu0
        %v783 = vadd.f32 0.0, %v782
        %v784 = vpop.f32.mrb[0].mxu0
        %v785 = vpop.f32.mrb[0].mxu0
        %v786 = vpop.f32.mrb[0].mxu0
        %787 = vdwg.mxu0
        %788 = vrot.lane.b32.xlu0 %v643, 96
        %v789 = vpop.permute.xlu0 %788
        %v791 = vsel %vm282, %v643, 0
        %v794 = vsel %vm282, %v789, 0
        %796 = vmatprep.subr.bf16.mxu0 0
        %797 = vmatpush1.bf16.xpose.msra.mxu0 %v794
        %798 = vmatprep.subr.bf16.mxu0 0
        %799 = vmatpush1.bf16.xpose.msra.mxu0 0
        %800 = vmatprep.subr.bf16.mxu0 0
        %801 = vmatpush1.bf16.xpose.msra.mxu0 0
        %802 = vmatprep.subr.bf16.mxu0 0
        %803 = vmatpush1.bf16.xpose.msra.mxu0 0
        %804 = vmatprep.subr.bf16.mxu0 0
        %805 = vmatpush1.bf16.xpose.msra.mxu0 0
        %806 = vmatprep.subr.bf16.mxu0 0
        %807 = vmatpush1.bf16.xpose.msra.mxu0 0
        %808 = vmatprep.subr.bf16.mxu0 0
        %809 = vmatpush1.bf16.xpose.msra.mxu0 0
        %810 = vmatprep.subr.bf16.mxu0 0
        %811 = vmatpush1.bf16.xpose.msra.mxu0 0
        %812 = vmatprep.subr.bf16.mxu0 0
        %813 = vmatpush1.bf16.xpose.msra.mxu0 0
        %814 = vmatprep.subr.bf16.mxu0 0
        %815 = vmatpush1.bf16.xpose.msra.mxu0 0
        %816 = vmatprep.subr.bf16.mxu0 0
        %817 = vmatpush1.bf16.xpose.msra.mxu0 0
        %818 = vmatprep.subr.bf16.mxu0 0
        %819 = vmatpush1.bf16.xpose.msra.mxu0 0
        %820 = vmatprep.subr.bf16.mxu0 0
        %821 = vmatpush1.bf16.xpose.msra.mxu0 0
        %822 = vmatprep.subr.bf16.mxu0 0
        %823 = vmatpush1.bf16.xpose.msra.mxu0 0
        %824 = vmatprep.subr.bf16.mxu0 0
        %825 = vmatpush1.bf16.xpose.msra.mxu0 0
        %826 = vmatprep.subr.bf16.mxu0 0
        %827 = vmatpush1.bf16.xpose.msra.mxu0 0
        %828 = vmatprep.mubr.bf16.mxu0 0
        %829 = vmatmul.mubr.bf16.gmra.mrb[0].mxu0 %v791
        %v830 = vpop.f32.mrb[0].mxu0
        %v831 = vadd.f32 0.0, %v830
        %v832 = vpop.f32.mrb[0].mxu0
        %v833 = vpop.f32.mrb[0].mxu0
        %v834 = vpop.f32.mrb[0].mxu0
        %835 = vdwg.mxu0
        %v836 = vmul.f32 %v687, 0.35355338
        %v837 = vmul.f32 %v735, 0.35355338
        %v838 = vmul.f32 %v783, 0.35355338
        %v839 = vmul.f32 %v831, 0.35355338
        %v840 = vsel %vm282, %v836, -inf
        %841 = vmax.xlane.f32.xlu0 %v840
        %v842 = vpop.xlane.xlu0 %841
        %v843 = vsel %vm282, %v837, -inf
        %844 = vmax.xlane.f32.xlu0 %v843
        %v845 = vpop.xlane.xlu0 %844
        %v846 = vsel %vm282, %v838, -inf
        %847 = vmax.xlane.f32.xlu0 %v846
        %v848 = vpop.xlane.xlu0 %847
        %v849 = vsel %vm282, %v839, -inf
        %850 = vmax.xlane.f32.xlu0 %v849
        %v851 = vpop.xlane.xlu0 %850
        %v852 = vsub.f32 %v836, %v842
        %v853 = vsub.f32 %v837, %v845
        %v854 = vsub.f32 %v838, %v848
        %v855 = vsub.f32 %v839, %v851
        %v856 = vmul.f32 %v852, 1.442695
        %v857 = vpow.pop %v856
        %v858 = vmul.f32 %v853, 1.442695
        %v859 = vpow.pop %v858
        %v860 = vmul.f32 %v854, 1.442695
        %v861 = vpow.pop %v860
        %v862 = vmul.f32 %v855, 1.442695
        %v863 = vpow.pop %v862
        %v864 = vsel %vm282, %v857, 0.0
        %865 = vadd.xlane.f32.xlu0 %v864
        %v866 = vpop.xlane.xlu0 %865
        %v867 = vsel %vm282, %v859, 0.0
        %868 = vadd.xlane.f32.xlu0 %v867
        %v869 = vpop.xlane.xlu0 %868
        %v870 = vsel %vm282, %v861, 0.0
        %871 = vadd.xlane.f32.xlu0 %v870
        %v872 = vpop.xlane.xlu0 %871
        %v873 = vsel %vm282, %v863, 0.0
        %874 = vadd.xlane.f32.xlu0 %v873
        %v875 = vpop.xlane.xlu0 %874
        %v876 = vrcp.pop %v866
        %v877 = vrcp.pop %v869
        %v878 = vrcp.pop %v872
        %v879 = vrcp.pop %v875
        %v880 = vmul.f32 %v857, %v876
        %v881 = vmul.f32 %v859, %v877
        %v882 = vmul.f32 %v861, %v878
        %v883 = vmul.f32 %v863, %v879
        %v884 = vpack.c.bf16 %v880, %v880
        %v885 = vpack.c.bf16 %v881, %v881
        %v886 = vpack.c.bf16 %v882, %v882
        %v887 = vpack.c.bf16 %v883, %v883
        %888 = vrot.lane.b32.xlu0 %v636, 64
        %v889 = vpop.permute.xlu0 %888
        %v891 = vsel %vm282, %v884, 0
        %v894 = vsel %vm270, %v889, 0
        %896 = vmatprep.subr.bf16.mxu0 0
        %897 = vmatpush1.bf16.msra.mxu0 %v894
        %898 = vmatprep.subr.bf16.mxu0 0
        %899 = vmatpush1.bf16.msra.mxu0 0
        %900 = vmatprep.subr.bf16.mxu0 0
        %901 = vmatpush1.bf16.msra.mxu0 0
        %902 = vmatprep.subr.bf16.mxu0 0
        %903 = vmatpush1.bf16.msra.mxu0 0
        %904 = vmatprep.subr.bf16.mxu0 0
        %905 = vmatpush1.bf16.msra.mxu0 0
        %906 = vmatprep.subr.bf16.mxu0 0
        %907 = vmatpush1.bf16.msra.mxu0 0
        %908 = vmatprep.subr.bf16.mxu0 0
        %909 = vmatpush1.bf16.msra.mxu0 0
        %910 = vmatprep.subr.bf16.mxu0 0
        %911 = vmatpush1.bf16.msra.mxu0 0
        %912 = vmatprep.subr.bf16.mxu0 0
        %913 = vmatpush1.bf16.msra.mxu0 0
        %914 = vmatprep.subr.bf16.mxu0 0
        %915 = vmatpush1.bf16.msra.mxu0 0
        %916 = vmatprep.subr.bf16.mxu0 0
        %917 = vmatpush1.bf16.msra.mxu0 0
        %918 = vmatprep.subr.bf16.mxu0 0
        %919 = vmatpush1.bf16.msra.mxu0 0
        %920 = vmatprep.subr.bf16.mxu0 0
        %921 = vmatpush1.bf16.msra.mxu0 0
        %922 = vmatprep.subr.bf16.mxu0 0
        %923 = vmatpush1.bf16.msra.mxu0 0
        %924 = vmatprep.subr.bf16.mxu0 0
        %925 = vmatpush1.bf16.msra.mxu0 0
        %926 = vmatprep.subr.bf16.mxu0 0
        %927 = vmatpush1.bf16.msra.mxu0 0
        %928 = vmatprep.mubr.bf16.mxu0 0
        %929 = vmatmul.mubr.bf16.gmra.mrb[0].mxu0 %v891
        %v930 = vpop.f32.mrb[0].mxu0
        %v931 = vadd.f32 0.0, %v930
        %v932 = vpop.f32.mrb[0].mxu0
        %v933 = vpop.f32.mrb[0].mxu0
        %v934 = vpop.f32.mrb[0].mxu0
        %935 = vdwg.mxu0
        %936 = vrot.lane.b32.xlu0 %v639, 64
        %v937 = vpop.permute.xlu0 %936
        %v939 = vsel %vm282, %v885, 0
        %v942 = vsel %vm270, %v937, 0
        %944 = vmatprep.subr.bf16.mxu0 0
        %945 = vmatpush1.bf16.msra.mxu0 %v942
        %946 = vmatprep.subr.bf16.mxu0 0
        %947 = vmatpush1.bf16.msra.mxu0 0
        %948 = vmatprep.subr.bf16.mxu0 0
        %949 = vmatpush1.bf16.msra.mxu0 0
        %950 = vmatprep.subr.bf16.mxu0 0
        %951 = vmatpush1.bf16.msra.mxu0 0
        %952 = vmatprep.subr.bf16.mxu0 0
        %953 = vmatpush1.bf16.msra.mxu0 0
        %954 = vmatprep.subr.bf16.mxu0 0
        %955 = vmatpush1.bf16.msra.mxu0 0
        %956 = vmatprep.subr.bf16.mxu0 0
        %957 = vmatpush1.bf16.msra.mxu0 0
        %958 = vmatprep.subr.bf16.mxu0 0
        %959 = vmatpush1.bf16.msra.mxu0 0
        %960 = vmatprep.subr.bf16.mxu0 0
        %961 = vmatpush1.bf16.msra.mxu0 0
        %962 = vmatprep.subr.bf16.mxu0 0
        %963 = vmatpush1.bf16.msra.mxu0 0
        %964 = vmatprep.subr.bf16.mxu0 0
        %965 = vmatpush1.bf16.msra.mxu0 0
        %966 = vmatprep.subr.bf16.mxu0 0
        %967 = vmatpush1.bf16.msra.mxu0 0
        %968 = vmatprep.subr.bf16.mxu0 0
        %969 = vmatpush1.bf16.msra.mxu0 0
        %970 = vmatprep.subr.bf16.mxu0 0
        %971 = vmatpush1.bf16.msra.mxu0 0
        %972 = vmatprep.subr.bf16.mxu0 0
        %973 = vmatpush1.bf16.msra.mxu0 0
        %974 = vmatprep.subr.bf16.mxu0 0
        %975 = vmatpush1.bf16.msra.mxu0 0
        %976 = vmatprep.mubr.bf16.mxu0 0
        %977 = vmatmul.mubr.bf16.gmra.mrb[0].mxu0 %v939
        %v978 = vpop.f32.mrb[0].mxu0
        %v979 = vadd.f32 0.0, %v978
        %v980 = vpop.f32.mrb[0].mxu0
        %v981 = vpop.f32.mrb[0].mxu0
        %v982 = vpop.f32.mrb[0].mxu0
        %983 = vdwg.mxu0
        %984 = vrot.lane.b32.xlu0 %v641, 64
        %v985 = vpop.permute.xlu0 %984
        %v987 = vsel %vm282, %v886, 0
        %v990 = vsel %vm270, %v985, 0
        %992 = vmatprep.subr.bf16.mxu0 0
        %993 = vmatpush1.bf16.msra.mxu0 %v990
        %994 = vmatprep.subr.bf16.mxu0 0
        %995 = vmatpush1.bf16.msra.mxu0 0
        %996 = vmatprep.subr.bf16.mxu0 0
        %997 = vmatpush1.bf16.msra.mxu0 0
        %998 = vmatprep.subr.bf16.mxu0 0
        %999 = vmatpush1.bf16.msra.mxu0 0
        %1000 = vmatprep.subr.bf16.mxu0 0
        %1001 = vmatpush1.bf16.msra.mxu0 0
        %1002 = vmatprep.subr.bf16.mxu0 0
        %1003 = vmatpush1.bf16.msra.mxu0 0
        %1004 = vmatprep.subr.bf16.mxu0 0
        %1005 = vmatpush1.bf16.msra.mxu0 0
        %1006 = vmatprep.subr.bf16.mxu0 0
        %1007 = vmatpush1.bf16.msra.mxu0 0
        %1008 = vmatprep.subr.bf16.mxu0 0
        %1009 = vmatpush1.bf16.msra.mxu0 0
        %1010 = vmatprep.subr.bf16.mxu0 0
        %1011 = vmatpush1.bf16.msra.mxu0 0
        %1012 = vmatprep.subr.bf16.mxu0 0
        %1013 = vmatpush1.bf16.msra.mxu0 0
        %1014 = vmatprep.subr.bf16.mxu0 0
        %1015 = vmatpush1.bf16.msra.mxu0 0
        %1016 = vmatprep.subr.bf16.mxu0 0
        %1017 = vmatpush1.bf16.msra.mxu0 0
        %1018 = vmatprep.subr.bf16.mxu0 0
        %1019 = vmatpush1.bf16.msra.mxu0 0
        %1020 = vmatprep.subr.bf16.mxu0 0
        %1021 = vmatpush1.bf16.msra.mxu0 0
        %1022 = vmatprep.subr.bf16.mxu0 0
        %1023 = vmatpush1.bf16.msra.mxu0 0
        %1024 = vmatprep.mubr.bf16.mxu0 0
        %1025 = vmatmul.mubr.bf16.gmra.mrb[0].mxu0 %v987
        %v1026 = vpop.f32.mrb[0].mxu0
        %v1027 = vadd.f32 0.0, %v1026
        %v1028 = vpop.f32.mrb[0].mxu0
        %v1029 = vpop.f32.mrb[0].mxu0
        %v1030 = vpop.f32.mrb[0].mxu0
        %1031 = vdwg.mxu0
        %1032 = vrot.lane.b32.xlu0 %v643, 64
        %v1033 = vpop.permute.xlu0 %1032
        %v1035 = vsel %vm282, %v887, 0
        %v1038 = vsel %vm270, %v1033, 0
        %1040 = vmatprep.subr.bf16.mxu0 0
        %1041 = vmatpush1.bf16.msra.mxu0 %v1038
        %1042 = vmatprep.subr.bf16.mxu0 0
        %1043 = vmatpush1.bf16.msra.mxu0 0
        %1044 = vmatprep.subr.bf16.mxu0 0
        %1045 = vmatpush1.bf16.msra.mxu0 0
        %1046 = vmatprep.subr.bf16.mxu0 0
        %1047 = vmatpush1.bf16.msra.mxu0 0
        %1048 = vmatprep.subr.bf16.mxu0 0
        %1049 = vmatpush1.bf16.msra.mxu0 0
        %1050 = vmatprep.subr.bf16.mxu0 0
        %1051 = vmatpush1.bf16.msra.mxu0 0
        %1052 = vmatprep.subr.bf16.mxu0 0
        %1053 = vmatpush1.bf16.msra.mxu0 0
        %1054 = vmatprep.subr.bf16.mxu0 0
        %1055 = vmatpush1.bf16.msra.mxu0 0
        %1056 = vmatprep.subr.bf16.mxu0 0
        %1057 = vmatpush1.bf16.msra.mxu0 0
        %1058 = vmatprep.subr.bf16.mxu0 0
        %1059 = vmatpush1.bf16.msra.mxu0 0
        %1060 = vmatprep.subr.bf16.mxu0 0
        %1061 = vmatpush1.bf16.msra.mxu0 0
        %1062 = vmatprep.subr.bf16.mxu0 0
        %1063 = vmatpush1.bf16.msra.mxu0 0
        %1064 = vmatprep.subr.bf16.mxu0 0
        %1065 = vmatpush1.bf16.msra.mxu0 0
        %1066 = vmatprep.subr.bf16.mxu0 0
        %1067 = vmatpush1.bf16.msra.mxu0 0
        %1068 = vmatprep.subr.bf16.mxu0 0
        %1069 = vmatpush1.bf16.msra.mxu0 0
        %1070 = vmatprep.subr.bf16.mxu0 0
        %1071 = vmatpush1.bf16.msra.mxu0 0
        %1072 = vmatprep.mubr.bf16.mxu0 0
        %1073 = vmatmul.mubr.bf16.gmra.mrb[0].mxu0 %v1035
        %v1074 = vpop.f32.mrb[0].mxu0
        %v1075 = vadd.f32 0.0, %v1074
        %v1076 = vpop.f32.mrb[0].mxu0
        %v1077 = vpop.f32.mrb[0].mxu0
        %v1078 = vpop.f32.mrb[0].mxu0
        %1079 = vdwg.mxu0
        %1081 = vrot.lane.b32.xlu0 %v979, 8
        %v1082 = vpop.permute.xlu0 %1081
        %1085 = vrot.lane.b32.xlu0 %v1027, 16
        %v1086 = vpop.permute.xlu0 %1085
        %1089 = vrot.lane.b32.xlu0 %v1075, 24
        %v1090 = vpop.permute.xlu0 %1089
        %v1092 = vsel %vm282, %v931, %v1082
        %v1093 = vsel %vm285, %v1092, %v1086
        %v1094 = vsel %vm288, %v1093, %v1090
        %v1095 = vpack.c.bf16 %v1094, %v1094
        %v1096 = vld [vmem:[%s3 + $0xc] sm:$0x1]
        %v1097 = vlaneseq
        %v1098 = vshrl.u32 %v1097, 7
        %v1099 = vsub.s32 0, %v1098
        %v1100 = vrot.slane %v1096, %v1099
        %1101 = vrot.lane.b32.xlu0 %v589, 32
        %v1102 = vpop.permute.xlu0 %1101
        %1103 = vrot.lane.b32.xlu0 %v590, 32
        %v1104 = vpop.permute.xlu0 %1103
        %v1108 = vsel %vm291, %v1095, 0
        %1110 = vmatprep.subr.bf16.mxu0 0
        %1111 = vmatpush1.bf16.msra.mxu0 %v1102
        %1112 = vmatprep.subr.bf16.mxu0 0
        %1113 = vmatpush1.bf16.msra.mxu0 %v1104
        %1114 = vmatprep.subr.bf16.mxu0 0
        %1115 = vmatpush1.bf16.msra.mxu0 0
        %1116 = vmatprep.subr.bf16.mxu0 0
        %1117 = vmatpush1.bf16.msra.mxu0 0
        %1118 = vmatprep.subr.bf16.mxu0 0
        %1119 = vmatpush1.bf16.msra.mxu0 0
        %1120 = vmatprep.subr.bf16.mxu0 0
        %1121 = vmatpush1.bf16.msra.mxu0 0
        %1122 = vmatprep.subr.bf16.mxu0 0
        %1123 = vmatpush1.bf16.msra.mxu0 0
        %1124 = vmatprep.subr.bf16.mxu0 0
        %1125 = vmatpush1.bf16.msra.mxu0 0
        %1126 = vmatprep.subr.bf16.mxu0 0
        %1127 = vmatpush1.bf16.msra.mxu0 0
        %1128 = vmatprep.subr.bf16.mxu0 0
        %1129 = vmatpush1.bf16.msra.mxu0 0
        %1130 = vmatprep.subr.bf16.mxu0 0
        %1131 = vmatpush1.bf16.msra.mxu0 0
        %1132 = vmatprep.subr.bf16.mxu0 0
        %1133 = vmatpush1.bf16.msra.mxu0 0
        %1134 = vmatprep.subr.bf16.mxu0 0
        %1135 = vmatpush1.bf16.msra.mxu0 0
        %1136 = vmatprep.subr.bf16.mxu0 0
        %1137 = vmatpush1.bf16.msra.mxu0 0
        %1138 = vmatprep.subr.bf16.mxu0 0
        %1139 = vmatpush1.bf16.msra.mxu0 0
        %1140 = vmatprep.subr.bf16.mxu0 0
        %1141 = vmatpush1.bf16.msra.mxu0 0
        %1142 = vmatprep.mubr.bf16.mxu0 0
        %1143 = vmatmul.mubr.bf16.gmra.mrb[0].mxu0 %v1108
        %v1144 = vpop.f32.mrb[0].mxu0
        %v1145 = vadd.f32 %v1100, %v1144
        %v1146 = vpop.f32.mrb[0].mxu0
        %v1147 = vpop.f32.mrb[0].mxu0
        %v1148 = vpop.f32.mrb[0].mxu0
        %1149 = vdwg.mxu0
        %v1150 = vadd.f32 %v550, %v1145
        %v1151 = vld [vmem:[%s3 + $0xf] sm:$0x1]
        %v1152 = vld [vmem:[%s3 + $0x10] sm:$0x1]
        %v1153 = vsel %vm291, %v1150, 0.0
        %1154 = vadd.xlane.f32.xlu0 %v1153
        %v1155 = vpop.xlane.xlu0 %1154
        %v1156 = vrcp.pop 32.0
        %v1157 = vmul.f32 %v1155, %v1156
        %v1158 = vsub.f32 %v1150, %v1157
        %v1159 = vmul.f32 %v1158, %v1158
        %v1160 = vsel %vm291, %v1159, 0.0
        %1161 = vadd.xlane.f32.xlu0 %v1160
        %v1162 = vpop.xlane.xlu0 %1161
        %v1163 = vmul.f32 %v1162, %v1156
        %v1164 = vadd.f32 %v1163, 1e-05
        %v1165 = vrsqrt.pop %v1164
        %v1166 = vmul.f32 %v1158, %v1165
        %v1167 = vlaneseq
        %v1168 = vshrl.u32 %v1167, 7
        %v1169 = vsub.s32 0, %v1168
        %v1170 = vrot.slane %v1151, %v1169
        %v1171 = vmul.f32 %v1166, %v1170
        %v1172 = vlaneseq
        %v1173 = vshrl.u32 %v1172, 7
        %v1174 = vsub.s32 0, %v1173
        %v1175 = vrot.slane %v1152, %v1174
        %v1176 = vadd.f32 %v1171, %v1175
        %v1177 = vpack.c.bf16 %v1176, %v1176
        %v1178 = vld [vmem:[%s3 + $0xd] sm:$0x1]
        %v1179 = vlaneseq
        %v1180 = vshrl.u32 %v1179, 7
        %v1181 = vsub.s32 0, %v1180
        %v1182 = vrot.slane %v1178, %v1181
        %v1187 = vunpack.c.l.b16 %v555
        %v1188 = vunpack.c.l.b16 %v556
        %v1189 = vunpack.c.l.b16 %v557
        %v1190 = vunpack.c.l.b16 %v558
        %v1191 = vpack.c.b16 %v1188, %v1187
        %v1192 = vpack.c.b16 %v1190, %v1189
        %v1196 = vsel %vm291, %v1177, 0
        %1198 = vmatprep.subr.bf16.mxu0 0
        %1199 = vmatpush1.bf16.msra.mxu0 %v1191
        %1200 = vmatprep.subr.bf16.mxu0 0
        %1201 = vmatpush1.bf16.msra.mxu0 %v1192
        %1202 = vmatprep.subr.bf16.mxu0 0
        %1203 = vmatpush1.bf16.msra.mxu0 0
        %1204 = vmatprep.subr.bf16.mxu0 0
        %1205 = vmatpush1.bf16.msra.mxu0 0
        %1206 = vmatprep.subr.bf16.mxu0 0
        %1207 = vmatpush1.bf16.msra.mxu0 0
        %1208 = vmatprep.subr.bf16.mxu0 0
        %1209 = vmatpush1.bf16.msra.mxu0 0
        %1210 = vmatprep.subr.bf16.mxu0 0
        %1211 = vmatpush1.bf16.msra.mxu0 0
        %1212 = vmatprep.subr.bf16.mxu0 0
        %1213 = vmatpush1.bf16.msra.mxu0 0
        %1214 = vmatprep.subr.bf16.mxu0 0
        %1215 = vmatpush1.bf16.msra.mxu0 0
        %1216 = vmatprep.subr.bf16.mxu0 0
        %1217 = vmatpush1.bf16.msra.mxu0 0
        %1218 = vmatprep.subr.bf16.mxu0 0
        %1219 = vmatpush1.bf16.msra.mxu0 0
        %1220 = vmatprep.subr.bf16.mxu0 0
        %1221 = vmatpush1.bf16.msra.mxu0 0
        %1222 = vmatprep.subr.bf16.mxu0 0
        %1223 = vmatpush1.bf16.msra.mxu0 0
        %1224 = vmatprep.subr.bf16.mxu0 0
        %1225 = vmatpush1.bf16.msra.mxu0 0
        %1226 = vmatprep.subr.bf16.mxu0 0
        %1227 = vmatpush1.bf16.msra.mxu0 0
        %1228 = vmatprep.subr.bf16.mxu0 0
        %1229 = vmatpush1.bf16.msra.mxu0 0
        %1230 = vmatprep.mubr.bf16.mxu0 0
        %1231 = vmatmul.mubr.bf16.gmra.mrb[0].mxu0 %v1196
        %v1232 = vpop.f32.mrb[0].mxu0
        %v1233 = vadd.f32 %v1182, %v1232
        %v1234 = vpop.f32.mrb[0].mxu0
        %v1235 = vpop.f32.mrb[0].mxu0
        %v1236 = vpop.f32.mrb[0].mxu0
        %1237 = vdwg.mxu0
        %v1238 = vmax.f32 %v1233, 0.0
        %v1239 = vpack.c.bf16 %v1238, %v1238
        %v1240 = vld [vmem:[%s3 + $0xe] sm:$0x1]
        %v1241 = vlaneseq
        %v1242 = vshrl.u32 %v1241, 7
        %v1243 = vsub.s32 0, %v1242
        %v1244 = vrot.slane %v1240, %v1243
        %v1261 = vunpack.c.l.b16 %v559
        %v1262 = vunpack.c.l.b16 %v560
        %v1263 = vunpack.c.l.b16 %v561
        %v1264 = vunpack.c.l.b16 %v562
        %v1265 = vunpack.c.l.b16 %v563
        %v1266 = vunpack.c.l.b16 %v564
        %v1267 = vunpack.c.l.b16 %v565
        %v1268 = vunpack.c.l.b16 %v566
        %v1269 = vunpack.c.l.b16 %v567
        %v1270 = vunpack.c.l.b16 %v568
        %v1271 = vunpack.c.l.b16 %v569
        %v1272 = vunpack.c.l.b16 %v570
        %v1273 = vunpack.c.l.b16 %v571
        %v1274 = vunpack.c.l.b16 %v572
        %v1275 = vunpack.c.l.b16 %v573
        %v1276 = vunpack.c.l.b16 %v574
        %v1277 = vpack.c.b16 %v1262, %v1261
        %v1278 = vpack.c.b16 %v1264, %v1263
        %v1279 = vpack.c.b16 %v1266, %v1265
        %v1280 = vpack.c.b16 %v1268, %v1267
        %v1281 = vpack.c.b16 %v1270, %v1269
        %v1282 = vpack.c.b16 %v1272, %v1271
        %v1283 = vpack.c.b16 %v1274, %v1273
        %v1284 = vpack.c.b16 %v1276, %v1275
        %1293 = vmatprep.subr.bf16.mxu0 0
        %1294 = vmatpush1.bf16.msra.mxu0 %v1277
        %1295 = vmatprep.subr.bf16.mxu0 0
        %1296 = vmatpush1.bf16.msra.mxu0 %v1278
        %1297 = vmatprep.subr.bf16.mxu0 0
        %1298 = vmatpush1.bf16.msra.mxu0 %v1279
        %1299 = vmatprep.subr.bf16.mxu0 0
        %1300 = vmatpush1.bf16.msra.mxu0 %v1280
        %1301 = vmatprep.subr.bf16.mxu0 0
        %1302 = vmatpush1.bf16.msra.mxu0 %v1281
        %1303 = vmatprep.subr.bf16.mxu0 0
        %1304 = vmatpush1.bf16.msra.mxu0 %v1282
        %1305 = vmatprep.subr.bf16.mxu0 0
        %1306 = vmatpush1.bf16.msra.mxu0 %v1283
        %1307 = vmatprep.subr.bf16.mxu0 0
        %1308 = vmatpush1.bf16.msra.mxu0 %v1284
        %1309 = vmatprep.subr.bf16.mxu0 0
        %1310 = vmatpush1.bf16.msra.mxu0 0
        %1311 = vmatprep.subr.bf16.mxu0 0
        %1312 = vmatpush1.bf16.msra.mxu0 0
        %1313 = vmatprep.subr.bf16.mxu0 0
        %1314 = vmatpush1.bf16.msra.mxu0 0
        %1315 = vmatprep.subr.bf16.mxu0 0
        %1316 = vmatpush1.bf16.msra.mxu0 0
        %1317 = vmatprep.subr.bf16.mxu0 0
        %1318 = vmatpush1.bf16.msra.mxu0 0
        %1319 = vmatprep.subr.bf16.mxu0 0
        %1320 = vmatpush1.bf16.msra.mxu0 0
        %1321 = vmatprep.subr.bf16.mxu0 0
        %1322 = vmatpush1.bf16.msra.mxu0 0
        %1323 = vmatprep.subr.bf16.mxu0 0
        %1324 = vmatpush1.bf16.msra.mxu0 0
        %1325 = vmatprep.mubr.bf16.mxu0 0
        %1326 = vmatmul.mubr.bf16.gmra.mrb[0].mxu0 %v1239
        %v1327 = vpop.f32.mrb[0].mxu0
        %v1328 = vadd.f32 %v1244, %v1327
        %v1329 = vpop.f32.mrb[0].mxu0
        %v1330 = vpop.f32.mrb[0].mxu0
        %v1331 = vpop.f32.mrb[0].mxu0
        %1332 = vdwg.mxu0
        %v1333 = vadd.f32 %v1176, %v1328
        %v1334 = vld [vmem:[%s3 + $0x11] sm:$0x1]
        %v1335 = vld [vmem:[%s3 + $0x12] sm:$0x1]
        %v1336 = vsel %vm291, %v1333, 0.0
        %1337 = vadd.xlane.f32.xlu0 %v1336
        %v1338 = vpop.xlane.xlu0 %1337
        %v1339 = vmul.f32 %v1338, %v1156
        %v1340 = vsub.f32 %v1333, %v1339
        %v1341 = vmul.f32 %v1340, %v1340
        %v1342 = vsel %vm291, %v1341, 0.0
        %1343 = vadd.xlane.f32.xlu0 %v1342
        %v1344 = vpop.xlane.xlu0 %1343
        %v1345 = vmul.f32 %v1344, %v1156
        %v1346 = vadd.f32 %v1345, 1e-05
        %v1347 = vrsqrt.pop %v1346
        %v1348 = vmul.f32 %v1340, %v1347
        %v1349 = vlaneseq
        %v1350 = vshrl.u32 %v1349, 7
        %v1351 = vsub.s32 0, %v1350
        %v1352 = vrot.slane %v1334, %v1351
        %v1353 = vmul.f32 %v1348, %v1352
        %v1354 = vlaneseq
        %v1355 = vshrl.u32 %v1354, 7
        %v1356 = vsub.s32 0, %v1355
        %v1357 = vrot.slane %v1335, %v1356
        %v1358 = vadd.f32 %v1353, %v1357
        %v1359 = vld [vmem:[#allocation3 + $0xa0] sm:$0xf]
        %v1360 = vld [vmem:[#allocation3 + $0xa8] sm:$0xf]
        %v1361 = vld [vmem:[#allocation3 + $0xb0] sm:$0xf]
        %v1362 = vld [vmem:[#allocation3 + $0xb8] sm:$0xf]
        %v1363 = vld [vmem:[#allocation3 + $0xa4] sm:$0xf]
        %v1364 = vld [vmem:[#allocation3 + $0xac] sm:$0xf]
        %v1365 = vld [vmem:[#allocation3 + $0xb4] sm:$0xf]
        %v1366 = vld [vmem:[#allocation3 + $0xbc] sm:$0xf]
        %v1367 = vld [vmem:[#allocation3 + $0xc0] sm:$0xf]
        %v1368 = vld [vmem:[#allocation3 + $0xc8] sm:$0xf]
        %v1369 = vld [vmem:[#allocation3 + $0xd0] sm:$0xf]
        %v1370 = vld [vmem:[#allocation3 + $0xd8] sm:$0xf]
        %v1371 = vld [vmem:[#allocation3 + $0xe0] sm:$0xf]
        %v1372 = vld [vmem:[#allocation3 + $0xe8] sm:$0xf]
        %v1373 = vld [vmem:[#allocation3 + $0xf0] sm:$0xf]
        %v1374 = vld [vmem:[#allocation3 + $0xf8] sm:$0xf]
        %v1375 = vld [vmem:[#allocation3 + $0x100] sm:$0xf]
        %v1376 = vld [vmem:[#allocation3 + $0x108] sm:$0xf]
        %v1377 = vld [vmem:[#allocation3 + $0x110] sm:$0xf]
        %v1378 = vld [vmem:[#allocation3 + $0x118] sm:$0xf]
        %v1379 = vld [vmem:[#allocation3 + $0x120] sm:$0xf]
        %v1380 = vld [vmem:[#allocation3 + $0x128] sm:$0xf]
        %v1381 = vld [vmem:[#allocation3 + $0x130] sm:$0xf]
        %v1382 = vld [vmem:[#allocation3 + $0x138] sm:$0xf]
        %v1383 = vpack.c.bf16 %v1358, %v1358
        %v1384 = vld [vmem:[%s3 + $0x13] sm:$0x1]
        %v1385 = vlaneseq
        %v1386 = vshrl.u32 %v1385, 7
        %v1387 = vsub.s32 0, %v1386
        %v1388 = vrot.slane %v1384, %v1387
        %v1393 = vunpack.c.l.b16 %v1359
        %v1394 = vunpack.c.l.b16 %v1360
        %v1395 = vunpack.c.l.b16 %v1361
        %v1396 = vunpack.c.l.b16 %v1362
        %v1397 = vpack.c.b16 %v1394, %v1393
        %v1398 = vpack.c.b16 %v1396, %v1395
        %v1402 = vsel %vm291, %v1383, 0
        %1404 = vmatprep.subr.bf16.mxu0 0
        %1405 = vmatpush1.bf16.msra.mxu0 %v1397
        %1406 = vmatprep.subr.bf16.mxu0 0
        %1407 = vmatpush1.bf16.msra.mxu0 %v1398
        %1408 = vmatprep.subr.bf16.mxu0 0
        %1409 = vmatpush1.bf16.msra.mxu0 0
        %1410 = vmatprep.subr.bf16.mxu0 0
        %1411 = vmatpush1.bf16.msra.mxu0 0
        %1412 = vmatprep.subr.bf16.mxu0 0
        %1413 = vmatpush1.bf16.msra.mxu0 0
        %1414 = vmatprep.subr.bf16.mxu0 0
        %1415 = vmatpush1.bf16.msra.mxu0 0
        %1416 = vmatprep.subr.bf16.mxu0 0
        %1417 = vmatpush1.bf16.msra.mxu0 0
        %1418 = vmatprep.subr.bf16.mxu0 0
        %1419 = vmatpush1.bf16.msra.mxu0 0
        %1420 = vmatprep.subr.bf16.mxu0 0
        %1421 = vmatpush1.bf16.msra.mxu0 0
        %1422 = vmatprep.subr.bf16.mxu0 0
        %1423 = vmatpush1.bf16.msra.mxu0 0
        %1424 = vmatprep.subr.bf16.mxu0 0
        %1425 = vmatpush1.bf16.msra.mxu0 0
        %1426 = vmatprep.subr.bf16.mxu0 0
        %1427 = vmatpush1.bf16.msra.mxu0 0
        %1428 = vmatprep.subr.bf16.mxu0 0
        %1429 = vmatpush1.bf16.msra.mxu0 0
        %1430 = vmatprep.subr.bf16.mxu0 0
        %1431 = vmatpush1.bf16.msra.mxu0 0
        %1432 = vmatprep.subr.bf16.mxu0 0
        %1433 = vmatpush1.bf16.msra.mxu0 0
        %1434 = vmatprep.subr.bf16.mxu0 0
        %1435 = vmatpush1.bf16.msra.mxu0 0
        %1436 = vmatprep.mubr.bf16.mxu0 0
        %1437 = vmatmul.mubr.bf16.gmra.mrb[0].mxu0 %v1402
        %v1438 = vpop.f32.mrb[0].mxu0
        %v1439 = vadd.f32 %v1388, %v1438
        %v1440 = vpop.f32.mrb[0].mxu0
        %v1441 = vpop.f32.mrb[0].mxu0
        %v1442 = vpop.f32.mrb[0].mxu0
        %1443 = vdwg.mxu0
        %v1444 = vpack.c.bf16 %v1439, %v1439
        %1446 = vrot.lane.b32.xlu0 %v1444, 120
        %v1447 = vpop.permute.xlu0 %1446
        %1448 = vrot.lane.b32.xlu0 %v1444, 112
        %v1449 = vpop.permute.xlu0 %1448
        %1450 = vrot.lane.b32.xlu0 %v1444, 104
        %v1451 = vpop.permute.xlu0 %1450
        %1452 = vrot.lane.b32.xlu0 %v1444, 96
        %v1453 = vpop.permute.xlu0 %1452
        %v1455 = vsel %vm282, %v1444, 0
        %v1458 = vsel %vm282, %v1453, 0
        %1460 = vmatprep.subr.bf16.mxu0 0
        %1461 = vmatpush1.bf16.xpose.msra.mxu0 %v1458
        %1462 = vmatprep.subr.bf16.mxu0 0
        %1463 = vmatpush1.bf16.xpose.msra.mxu0 0
        %1464 = vmatprep.subr.bf16.mxu0 0
        %1465 = vmatpush1.bf16.xpose.msra.mxu0 0
        %1466 = vmatprep.subr.bf16.mxu0 0
        %1467 = vmatpush1.bf16.xpose.msra.mxu0 0
        %1468 = vmatprep.subr.bf16.mxu0 0
        %1469 = vmatpush1.bf16.xpose.msra.mxu0 0
        %1470 = vmatprep.subr.bf16.mxu0 0
        %1471 = vmatpush1.bf16.xpose.msra.mxu0 0
        %1472 = vmatprep.subr.bf16.mxu0 0
        %1473 = vmatpush1.bf16.xpose.msra.mxu0 0
        %1474 = vmatprep.subr.bf16.mxu0 0
        %1475 = vmatpush1.bf16.xpose.msra.mxu0 0
        %1476 = vmatprep.subr.bf16.mxu0 0
        %1477 = vmatpush1.bf16.xpose.msra.mxu0 0
        %1478 = vmatprep.subr.bf16.mxu0 0
        %1479 = vmatpush1.bf16.xpose.msra.mxu0 0
        %1480 = vmatprep.subr.bf16.mxu0 0
        %1481 = vmatpush1.bf16.xpose.msra.mxu0 0
        %1482 = vmatprep.subr.bf16.mxu0 0
        %1483 = vmatpush1.bf16.xpose.msra.mxu0 0
        %1484 = vmatprep.subr.bf16.mxu0 0
        %1485 = vmatpush1.bf16.xpose.msra.mxu0 0
        %1486 = vmatprep.subr.bf16.mxu0 0
        %1487 = vmatpush1.bf16.xpose.msra.mxu0 0
        %1488 = vmatprep.subr.bf16.mxu0 0
        %1489 = vmatpush1.bf16.xpose.msra.mxu0 0
        %1490 = vmatprep.subr.bf16.mxu0 0
        %1491 = vmatpush1.bf16.xpose.msra.mxu0 0
        %1492 = vmatprep.mubr.bf16.mxu0 0
        %1493 = vmatmul.mubr.bf16.gmra.mrb[0].mxu0 %v1455
        %v1494 = vpop.f32.mrb[0].mxu0
        %v1495 = vadd.f32 0.0, %v1494
        %v1496 = vpop.f32.mrb[0].mxu0
        %v1497 = vpop.f32.mrb[0].mxu0
        %v1498 = vpop.f32.mrb[0].mxu0
        %1499 = vdwg.mxu0
        %1500 = vrot.lane.b32.xlu0 %v1447, 96
        %v1501 = vpop.permute.xlu0 %1500
        %v1503 = vsel %vm282, %v1447, 0
        %v1506 = vsel %vm282, %v1501, 0
        %1508 = vmatprep.subr.bf16.mxu0 0
        %1509 = vmatpush1.bf16.xpose.msra.mxu0 %v1506
        %1510 = vmatprep.subr.bf16.mxu0 0
        %1511 = vmatpush1.bf16.xpose.msra.mxu0 0
        %1512 = vmatprep.subr.bf16.mxu0 0
        %1513 = vmatpush1.bf16.xpose.msra.mxu0 0
        %1514 = vmatprep.subr.bf16.mxu0 0
        %1515 = vmatpush1.bf16.xpose.msra.mxu0 0
        %1516 = vmatprep.subr.bf16.mxu0 0
        %1517 = vmatpush1.bf16.xpose.msra.mxu0 0
        %1518 = vmatprep.subr.bf16.mxu0 0
        %1519 = vmatpush1.bf16.xpose.msra.mxu0 0
        %1520 = vmatprep.subr.bf16.mxu0 0
        %1521 = vmatpush1.bf16.xpose.msra.mxu0 0
        %1522 = vmatprep.subr.bf16.mxu0 0
        %1523 = vmatpush1.bf16.xpose.msra.mxu0 0
        %1524 = vmatprep.subr.bf16.mxu0 0
        %1525 = vmatpush1.bf16.xpose.msra.mxu0 0
        %1526 = vmatprep.subr.bf16.mxu0 0
        %1527 = vmatpush1.bf16.xpose.msra.mxu0 0
        %1528 = vmatprep.subr.bf16.mxu0 0
        %1529 = vmatpush1.bf16.xpose.msra.mxu0 0
        %1530 = vmatprep.subr.bf16.mxu0 0
        %1531 = vmatpush1.bf16.xpose.msra.mxu0 0
        %1532 = vmatprep.subr.bf16.mxu0 0
        %1533 = vmatpush1.bf16.xpose.msra.mxu0 0
        %1534 = vmatprep.subr.bf16.mxu0 0
        %1535 = vmatpush1.bf16.xpose.msra.mxu0 0
        %1536 = vmatprep.subr.bf16.mxu0 0
        %1537 = vmatpush1.bf16.xpose.msra.mxu0 0
        %1538 = vmatprep.subr.bf16.mxu0 0
        %1539 = vmatpush1.bf16.xpose.msra.mxu0 0
        %1540 = vmatprep.mubr.bf16.mxu0 0
        %1541 = vmatmul.mubr.bf16.gmra.mrb[0].mxu0 %v1503
        %v1542 = vpop.f32.mrb[0].mxu0
        %v1543 = vadd.f32 0.0, %v1542
        %v1544 = vpop.f32.mrb[0].mxu0
        %v1545 = vpop.f32.mrb[0].mxu0
        %v1546 = vpop.f32.mrb[0].mxu0
        %1547 = vdwg.mxu0
        %1548 = vrot.lane.b32.xlu0 %v1449, 96
        %v1549 = vpop.permute.xlu0 %1548
        %v1551 = vsel %vm282, %v1449, 0
        %v1554 = vsel %vm282, %v1549, 0
        %1556 = vmatprep.subr.bf16.mxu0 0
        %1557 = vmatpush1.bf16.xpose.msra.mxu0 %v1554
        %1558 = vmatprep.subr.bf16.mxu0 0
        %1559 = vmatpush1.bf16.xpose.msra.mxu0 0
        %1560 = vmatprep.subr.bf16.mxu0 0
        %1561 = vmatpush1.bf16.xpose.msra.mxu0 0
        %1562 = vmatprep.subr.bf16.mxu0 0
        %1563 = vmatpush1.bf16.xpose.msra.mxu0 0
        %1564 = vmatprep.subr.bf16.mxu0 0
        %1565 = vmatpush1.bf16.xpose.msra.mxu0 0
        %1566 = vmatprep.subr.bf16.mxu0 0
        %1567 = vmatpush1.bf16.xpose.msra.mxu0 0
        %1568 = vmatprep.subr.bf16.mxu0 0
        %1569 = vmatpush1.bf16.xpose.msra.mxu0 0
        %1570 = vmatprep.subr.bf16.mxu0 0
        %1571 = vmatpush1.bf16.xpose.msra.mxu0 0
        %1572 = vmatprep.subr.bf16.mxu0 0
        %1573 = vmatpush1.bf16.xpose.msra.mxu0 0
        %1574 = vmatprep.subr.bf16.mxu0 0
        %1575 = vmatpush1.bf16.xpose.msra.mxu0 0
        %1576 = vmatprep.subr.bf16.mxu0 0
        %1577 = vmatpush1.bf16.xpose.msra.mxu0 0
        %1578 = vmatprep.subr.bf16.mxu0 0
        %1579 = vmatpush1.bf16.xpose.msra.mxu0 0
        %1580 = vmatprep.subr.bf16.mxu0 0
        %1581 = vmatpush1.bf16.xpose.msra.mxu0 0
        %1582 = vmatprep.subr.bf16.mxu0 0
        %1583 = vmatpush1.bf16.xpose.msra.mxu0 0
        %1584 = vmatprep.subr.bf16.mxu0 0
        %1585 = vmatpush1.bf16.xpose.msra.mxu0 0
        %1586 = vmatprep.subr.bf16.mxu0 0
        %1587 = vmatpush1.bf16.xpose.msra.mxu0 0
        %1588 = vmatprep.mubr.bf16.mxu0 0
        %1589 = vmatmul.mubr.bf16.gmra.mrb[0].mxu0 %v1551
        %v1590 = vpop.f32.mrb[0].mxu0
        %v1591 = vadd.f32 0.0, %v1590
        %v1592 = vpop.f32.mrb[0].mxu0
        %v1593 = vpop.f32.mrb[0].mxu0
        %v1594 = vpop.f32.mrb[0].mxu0
        %1595 = vdwg.mxu0
        %1596 = vrot.lane.b32.xlu0 %v1451, 96
        %v1597 = vpop.permute.xlu0 %1596
        %v1599 = vsel %vm282, %v1451, 0
        %v1602 = vsel %vm282, %v1597, 0
        %1604 = vmatprep.subr.bf16.mxu0 0
        %1605 = vmatpush1.bf16.xpose.msra.mxu0 %v1602
        %1606 = vmatprep.subr.bf16.mxu0 0
        %1607 = vmatpush1.bf16.xpose.msra.mxu0 0
        %1608 = vmatprep.subr.bf16.mxu0 0
        %1609 = vmatpush1.bf16.xpose.msra.mxu0 0
        %1610 = vmatprep.subr.bf16.mxu0 0
        %1611 = vmatpush1.bf16.xpose.msra.mxu0 0
        %1612 = vmatprep.subr.bf16.mxu0 0
        %1613 = vmatpush1.bf16.xpose.msra.mxu0 0
        %1614 = vmatprep.subr.bf16.mxu0 0
        %1615 = vmatpush1.bf16.xpose.msra.mxu0 0
        %1616 = vmatprep.subr.bf16.mxu0 0
        %1617 = vmatpush1.bf16.xpose.msra.mxu0 0
        %1618 = vmatprep.subr.bf16.mxu0 0
        %1619 = vmatpush1.bf16.xpose.msra.mxu0 0
        %1620 = vmatprep.subr.bf16.mxu0 0
        %1621 = vmatpush1.bf16.xpose.msra.mxu0 0
        %1622 = vmatprep.subr.bf16.mxu0 0
        %1623 = vmatpush1.bf16.xpose.msra.mxu0 0
        %1624 = vmatprep.subr.bf16.mxu0 0
        %1625 = vmatpush1.bf16.xpose.msra.mxu0 0
        %1626 = vmatprep.subr.bf16.mxu0 0
        %1627 = vmatpush1.bf16.xpose.msra.mxu0 0
        %1628 = vmatprep.subr.bf16.mxu0 0
        %1629 = vmatpush1.bf16.xpose.msra.mxu0 0
        %1630 = vmatprep.subr.bf16.mxu0 0
        %1631 = vmatpush1.bf16.xpose.msra.mxu0 0
        %1632 = vmatprep.subr.bf16.mxu0 0
        %1633 = vmatpush1.bf16.xpose.msra.mxu0 0
        %1634 = vmatprep.subr.bf16.mxu0 0
        %1635 = vmatpush1.bf16.xpose.msra.mxu0 0
        %1636 = vmatprep.mubr.bf16.mxu0 0
        %1637 = vmatmul.mubr.bf16.gmra.mrb[0].mxu0 %v1599
        %v1638 = vpop.f32.mrb[0].mxu0
        %v1639 = vadd.f32 0.0, %v1638
        %v1640 = vpop.f32.mrb[0].mxu0
        %v1641 = vpop.f32.mrb[0].mxu0
        %v1642 = vpop.f32.mrb[0].mxu0
        %1643 = vdwg.mxu0
        %v1644 = vmul.f32 %v1495, 0.35355338
        %v1645 = vmul.f32 %v1543, 0.35355338
        %v1646 = vmul.f32 %v1591, 0.35355338
        %v1647 = vmul.f32 %v1639, 0.35355338
        %v1648 = vsel %vm282, %v1644, -inf
        %1649 = vmax.xlane.f32.xlu0 %v1648
        %v1650 = vpop.xlane.xlu0 %1649
        %v1651 = vsel %vm282, %v1645, -inf
        %1652 = vmax.xlane.f32.xlu0 %v1651
        %v1653 = vpop.xlane.xlu0 %1652
        %v1654 = vsel %vm282, %v1646, -inf
        %1655 = vmax.xlane.f32.xlu0 %v1654
        %v1656 = vpop.xlane.xlu0 %1655
        %v1657 = vsel %vm282, %v1647, -inf
        %1658 = vmax.xlane.f32.xlu0 %v1657
        %v1659 = vpop.xlane.xlu0 %1658
        %v1660 = vsub.f32 %v1644, %v1650
        %v1661 = vsub.f32 %v1645, %v1653
        %v1662 = vsub.f32 %v1646, %v1656
        %v1663 = vsub.f32 %v1647, %v1659
        %v1664 = vmul.f32 %v1660, 1.442695
        %v1665 = vpow.pop %v1664
        %v1666 = vmul.f32 %v1661, 1.442695
        %v1667 = vpow.pop %v1666
        %v1668 = vmul.f32 %v1662, 1.442695
        %v1669 = vpow.pop %v1668
        %v1670 = vmul.f32 %v1663, 1.442695
        %v1671 = vpow.pop %v1670
        %v1672 = vsel %vm282, %v1665, 0.0
        %1673 = vadd.xlane.f32.xlu0 %v1672
        %v1674 = vpop.xlane.xlu0 %1673
        %v1675 = vsel %vm282, %v1667, 0.0
        %1676 = vadd.xlane.f32.xlu0 %v1675
        %v1677 = vpop.xlane.xlu0 %1676
        %v1678 = vsel %vm282, %v1669, 0.0
        %1679 = vadd.xlane.f32.xlu0 %v1678
        %v1680 = vpop.xlane.xlu0 %1679
        %v1681 = vsel %vm282, %v1671, 0.0
        %1682 = vadd.xlane.f32.xlu0 %v1681
        %v1683 = vpop.xlane.xlu0 %1682
        %v1684 = vrcp.pop %v1674
        %v1685 = vrcp.pop %v1677
        %v1686 = vrcp.pop %v1680
        %v1687 = vrcp.pop %v1683
        %v1688 = vmul.f32 %v1665, %v1684
        %v1689 = vmul.f32 %v1667, %v1685
        %v1690 = vmul.f32 %v1669, %v1686
        %v1691 = vmul.f32 %v1671, %v1687
        %v1692 = vpack.c.bf16 %v1688, %v1688
        %v1693 = vpack.c.bf16 %v1689, %v1689
        %v1694 = vpack.c.bf16 %v1690, %v1690
        %v1695 = vpack.c.bf16 %v1691, %v1691
        %1696 = vrot.lane.b32.xlu0 %v1444, 64
        %v1697 = vpop.permute.xlu0 %1696
        %v1699 = vsel %vm282, %v1692, 0
        %v1702 = vsel %vm270, %v1697, 0
        %1704 = vmatprep.subr.bf16.mxu0 0
        %1705 = vmatpush1.bf16.msra.mxu0 %v1702
        %1706 = vmatprep.subr.bf16.mxu0 0
        %1707 = vmatpush1.bf16.msra.mxu0 0
        %1708 = vmatprep.subr.bf16.mxu0 0
        %1709 = vmatpush1.bf16.msra.mxu0 0
        %1710 = vmatprep.subr.bf16.mxu0 0
        %1711 = vmatpush1.bf16.msra.mxu0 0
        %1712 = vmatprep.subr.bf16.mxu0 0
        %1713 = vmatpush1.bf16.msra.mxu0 0
        %1714 = vmatprep.subr.bf16.mxu0 0
        %1715 = vmatpush1.bf16.msra.mxu0 0
        %1716 = vmatprep.subr.bf16.mxu0 0
        %1717 = vmatpush1.bf16.msra.mxu0 0
        %1718 = vmatprep.subr.bf16.mxu0 0
        %1719 = vmatpush1.bf16.msra.mxu0 0
        %1720 = vmatprep.subr.bf16.mxu0 0
        %1721 = vmatpush1.bf16.msra.mxu0 0
        %1722 = vmatprep.subr.bf16.mxu0 0
        %1723 = vmatpush1.bf16.msra.mxu0 0
        %1724 = vmatprep.subr.bf16.mxu0 0
        %1725 = vmatpush1.bf16.msra.mxu0 0
        %1726 = vmatprep.subr.bf16.mxu0 0
        %1727 = vmatpush1.bf16.msra.mxu0 0
        %1728 = vmatprep.subr.bf16.mxu0 0
        %1729 = vmatpush1.bf16.msra.mxu0 0
        %1730 = vmatprep.subr.bf16.mxu0 0
        %1731 = vmatpush1.bf16.msra.mxu0 0
        %1732 = vmatprep.subr.bf16.mxu0 0
        %1733 = vmatpush1.bf16.msra.mxu0 0
        %1734 = vmatprep.subr.bf16.mxu0 0
        %1735 = vmatpush1.bf16.msra.mxu0 0
        %1736 = vmatprep.mubr.bf16.mxu0 0
        %1737 = vmatmul.mubr.bf16.gmra.mrb[0].mxu0 %v1699
        %v1738 = vpop.f32.mrb[0].mxu0
        %v1739 = vadd.f32 0.0, %v1738
        %v1740 = vpop.f32.mrb[0].mxu0
        %v1741 = vpop.f32.mrb[0].mxu0
        %v1742 = vpop.f32.mrb[0].mxu0
        %1743 = vdwg.mxu0
        %1744 = vrot.lane.b32.xlu0 %v1447, 64
        %v1745 = vpop.permute.xlu0 %1744
        %v1747 = vsel %vm282, %v1693, 0
        %v1750 = vsel %vm270, %v1745, 0
        %1752 = vmatprep.subr.bf16.mxu0 0
        %1753 = vmatpush1.bf16.msra.mxu0 %v1750
        %1754 = vmatprep.subr.bf16.mxu0 0
        %1755 = vmatpush1.bf16.msra.mxu0 0
        %1756 = vmatprep.subr.bf16.mxu0 0
        %1757 = vmatpush1.bf16.msra.mxu0 0
        %1758 = vmatprep.subr.bf16.mxu0 0
        %1759 = vmatpush1.bf16.msra.mxu0 0
        %1760 = vmatprep.subr.bf16.mxu0 0
        %1761 = vmatpush1.bf16.msra.mxu0 0
        %1762 = vmatprep.subr.bf16.mxu0 0
        %1763 = vmatpush1.bf16.msra.mxu0 0
        %1764 = vmatprep.subr.bf16.mxu0 0
        %1765 = vmatpush1.bf16.msra.mxu0 0
        %1766 = vmatprep.subr.bf16.mxu0 0
        %1767 = vmatpush1.bf16.msra.mxu0 0
        %1768 = vmatprep.subr.bf16.mxu0 0
        %1769 = vmatpush1.bf16.msra.mxu0 0
        %1770 = vmatprep.subr.bf16.mxu0 0
        %1771 = vmatpush1.bf16.msra.mxu0 0
        %1772 = vmatprep.subr.bf16.mxu0 0
        %1773 = vmatpush1.bf16.msra.mxu0 0
        %1774 = vmatprep.subr.bf16.mxu0 0
        %1775 = vmatpush1.bf16.msra.mxu0 0
        %1776 = vmatprep.subr.bf16.mxu0 0
        %1777 = vmatpush1.bf16.msra.mxu0 0
        %1778 = vmatprep.subr.bf16.mxu0 0
        %1779 = vmatpush1.bf16.msra.mxu0 0
        %1780 = vmatprep.subr.bf16.mxu0 0
        %1781 = vmatpush1.bf16.msra.mxu0 0
        %1782 = vmatprep.subr.bf16.mxu0 0
        %1783 = vmatpush1.bf16.msra.mxu0 0
        %1784 = vmatprep.mubr.bf16.mxu0 0
        %1785 = vmatmul.mubr.bf16.gmra.mrb[0].mxu0 %v1747
        %v1786 = vpop.f32.mrb[0].mxu0
        %v1787 = vadd.f32 0.0, %v1786
        %v1788 = vpop.f32.mrb[0].mxu0
        %v1789 = vpop.f32.mrb[0].mxu0
        %v1790 = vpop.f32.mrb[0].mxu0
        %1791 = vdwg.mxu0
        %1792 = vrot.lane.b32.xlu0 %v1449, 64
        %v1793 = vpop.permute.xlu0 %1792
        %v1795 = vsel %vm282, %v1694, 0
        %v1798 = vsel %vm270, %v1793, 0
        %1800 = vmatprep.subr.bf16.mxu0 0
        %1801 = vmatpush1.bf16.msra.mxu0 %v1798
        %1802 = vmatprep.subr.bf16.mxu0 0
        %1803 = vmatpush1.bf16.msra.mxu0 0
        %1804 = vmatprep.subr.bf16.mxu0 0
        %1805 = vmatpush1.bf16.msra.mxu0 0
        %1806 = vmatprep.subr.bf16.mxu0 0
        %1807 = vmatpush1.bf16.msra.mxu0 0
        %1808 = vmatprep.subr.bf16.mxu0 0
        %1809 = vmatpush1.bf16.msra.mxu0 0
        %1810 = vmatprep.subr.bf16.mxu0 0
        %1811 = vmatpush1.bf16.msra.mxu0 0
        %1812 = vmatprep.subr.bf16.mxu0 0
        %1813 = vmatpush1.bf16.msra.mxu0 0
        %1814 = vmatprep.subr.bf16.mxu0 0
        %1815 = vmatpush1.bf16.msra.mxu0 0
        %1816 = vmatprep.subr.bf16.mxu0 0
        %1817 = vmatpush1.bf16.msra.mxu0 0
        %1818 = vmatprep.subr.bf16.mxu0 0
        %1819 = vmatpush1.bf16.msra.mxu0 0
        %1820 = vmatprep.subr.bf16.mxu0 0
        %1821 = vmatpush1.bf16.msra.mxu0 0
        %1822 = vmatprep.subr.bf16.mxu0 0
        %1823 = vmatpush1.bf16.msra.mxu0 0
        %1824 = vmatprep.subr.bf16.mxu0 0
        %1825 = vmatpush1.bf16.msra.mxu0 0
        %1826 = vmatprep.subr.bf16.mxu0 0
        %1827 = vmatpush1.bf16.msra.mxu0 0
        %1828 = vmatprep.subr.bf16.mxu0 0
        %1829 = vmatpush1.bf16.msra.mxu0 0
        %1830 = vmatprep.subr.bf16.mxu0 0
        %1831 = vmatpush1.bf16.msra.mxu0 0
        %1832 = vmatprep.mubr.bf16.mxu0 0
        %1833 = vmatmul.mubr.bf16.gmra.mrb[0].mxu0 %v1795
        %v1834 = vpop.f32.mrb[0].mxu0
        %v1835 = vadd.f32 0.0, %v1834
        %v1836 = vpop.f32.mrb[0].mxu0
        %v1837 = vpop.f32.mrb[0].mxu0
        %v1838 = vpop.f32.mrb[0].mxu0
        %1839 = vdwg.mxu0
        %1840 = vrot.lane.b32.xlu0 %v1451, 64
        %v1841 = vpop.permute.xlu0 %1840
        %v1843 = vsel %vm282, %v1695, 0
        %v1846 = vsel %vm270, %v1841, 0
        %1848 = vmatprep.subr.bf16.mxu0 0
        %1849 = vmatpush1.bf16.msra.mxu0 %v1846
        %1850 = vmatprep.subr.bf16.mxu0 0
        %1851 = vmatpush1.bf16.msra.mxu0 0
        %1852 = vmatprep.subr.bf16.mxu0 0
        %1853 = vmatpush1.bf16.msra.mxu0 0
        %1854 = vmatprep.subr.bf16.mxu0 0
        %1855 = vmatpush1.bf16.msra.mxu0 0
        %1856 = vmatprep.subr.bf16.mxu0 0
        %1857 = vmatpush1.bf16.msra.mxu0 0
        %1858 = vmatprep.subr.bf16.mxu0 0
        %1859 = vmatpush1.bf16.msra.mxu0 0
        %1860 = vmatprep.subr.bf16.mxu0 0
        %1861 = vmatpush1.bf16.msra.mxu0 0
        %1862 = vmatprep.subr.bf16.mxu0 0
        %1863 = vmatpush1.bf16.msra.mxu0 0
        %1864 = vmatprep.subr.bf16.mxu0 0
        %1865 = vmatpush1.bf16.msra.mxu0 0
        %1866 = vmatprep.subr.bf16.mxu0 0
        %1867 = vmatpush1.bf16.msra.mxu0 0
        %1868 = vmatprep.subr.bf16.mxu0 0
        %1869 = vmatpush1.bf16.msra.mxu0 0
        %1870 = vmatprep.subr.bf16.mxu0 0
        %1871 = vmatpush1.bf16.msra.mxu0 0
        %1872 = vmatprep.subr.bf16.mxu0 0
        %1873 = vmatpush1.bf16.msra.mxu0 0
        %1874 = vmatprep.subr.bf16.mxu0 0
        %1875 = vmatpush1.bf16.msra.mxu0 0
        %1876 = vmatprep.subr.bf16.mxu0 0
        %1877 = vmatpush1.bf16.msra.mxu0 0
        %1878 = vmatprep.subr.bf16.mxu0 0
        %1879 = vmatpush1.bf16.msra.mxu0 0
        %1880 = vmatprep.mubr.bf16.mxu0 0
        %1881 = vmatmul.mubr.bf16.gmra.mrb[0].mxu0 %v1843
        %v1882 = vpop.f32.mrb[0].mxu0
        %v1883 = vadd.f32 0.0, %v1882
        %v1884 = vpop.f32.mrb[0].mxu0
        %v1885 = vpop.f32.mrb[0].mxu0
        %v1886 = vpop.f32.mrb[0].mxu0
        %1887 = vdwg.mxu0
        %1889 = vrot.lane.b32.xlu0 %v1787, 8
        %v1890 = vpop.permute.xlu0 %1889
        %1893 = vrot.lane.b32.xlu0 %v1835, 16
        %v1894 = vpop.permute.xlu0 %1893
        %1897 = vrot.lane.b32.xlu0 %v1883, 24
        %v1898 = vpop.permute.xlu0 %1897
        %v1900 = vsel %vm282, %v1739, %v1890
        %v1901 = vsel %vm285, %v1900, %v1894
        %v1902 = vsel %vm288, %v1901, %v1898
        %v1903 = vpack.c.bf16 %v1902, %v1902
        %v1904 = vld [vmem:[%s3 + $0x14] sm:$0x1]
        %v1905 = vlaneseq
        %v1906 = vshrl.u32 %v1905, 7
        %v1907 = vsub.s32 0, %v1906
        %v1908 = vrot.slane %v1904, %v1907
        %1909 = vrot.lane.b32.xlu0 %v1397, 32
        %v1910 = vpop.permute.xlu0 %1909
        %1911 = vrot.lane.b32.xlu0 %v1398, 32
        %v1912 = vpop.permute.xlu0 %1911
        %v1916 = vsel %vm291, %v1903, 0
        %1918 = vmatprep.subr.bf16.mxu0 0
        %1919 = vmatpush1.bf16.msra.mxu0 %v1910
        %1920 = vmatprep.subr.bf16.mxu0 0
        %1921 = vmatpush1.bf16.msra.mxu0 %v1912
        %1922 = vmatprep.subr.bf16.mxu0 0
        %1923 = vmatpush1.bf16.msra.mxu0 0
        %1924 = vmatprep.subr.bf16.mxu0 0
        %1925 = vmatpush1.bf16.msra.mxu0 0
        %1926 = vmatprep.subr.bf16.mxu0 0
        %1927 = vmatpush1.bf16.msra.mxu0 0
        %1928 = vmatprep.subr.bf16.mxu0 0
        %1929 = vmatpush1.bf16.msra.mxu0 0
        %1930 = vmatprep.subr.bf16.mxu0 0
        %1931 = vmatpush1.bf16.msra.mxu0 0
        %1932 = vmatprep.subr.bf16.mxu0 0
        %1933 = vmatpush1.bf16.msra.mxu0 0
        %1934 = vmatprep.subr.bf16.mxu0 0
        %1935 = vmatpush1.bf16.msra.mxu0 0
        %1936 = vmatprep.subr.bf16.mxu0 0
        %1937 = vmatpush1.bf16.msra.mxu0 0
        %1938 = vmatprep.subr.bf16.mxu0 0
        %1939 = vmatpush1.bf16.msra.mxu0 0
        %1940 = vmatprep.subr.bf16.mxu0 0
        %1941 = vmatpush1.bf16.msra.mxu0 0
        %1942 = vmatprep.subr.bf16.mxu0 0
        %1943 = vmatpush1.bf16.msra.mxu0 0
        %1944 = vmatprep.subr.bf16.mxu0 0
        %1945 = vmatpush1.bf16.msra.mxu0 0
        %1946 = vmatprep.subr.bf16.mxu0 0
        %1947 = vmatpush1.bf16.msra.mxu0 0
        %1948 = vmatprep.subr.bf16.mxu0 0
        %1949 = vmatpush1.bf16.msra.mxu0 0
        %1950 = vmatprep.mubr.bf16.mxu0 0
        %1951 = vmatmul.mubr.bf16.gmra.mrb[0].mxu0 %v1916
        %v1952 = vpop.f32.mrb[0].mxu0
        %v1953 = vadd.f32 %v1908, %v1952
        %v1954 = vpop.f32.mrb[0].mxu0
        %v1955 = vpop.f32.mrb[0].mxu0
        %v1956 = vpop.f32.mrb[0].mxu0
        %1957 = vdwg.mxu0
        %v1958 = vadd.f32 %v1358, %v1953
        %v1959 = vld [vmem:[%s3 + $0x17] sm:$0x1]
        %v1960 = vld [vmem:[%s3 + $0x18] sm:$0x1]
        %v1961 = vsel %vm291, %v1958, 0.0
        %1962 = vadd.xlane.f32.xlu0 %v1961
        %v1963 = vpop.xlane.xlu0 %1962
        %v1964 = vmul.f32 %v1963, %v1156
        %v1965 = vsub.f32 %v1958, %v1964
        %v1966 = vmul.f32 %v1965, %v1965
        %v1967 = vsel %vm291, %v1966, 0.0
        %1968 = vadd.xlane.f32.xlu0 %v1967
        %v1969 = vpop.xlane.xlu0 %1968
        %v1970 = vmul.f32 %v1969, %v1156
        %v1971 = vadd.f32 %v1970, 1e-05
        %v1972 = vrsqrt.pop %v1971
        %v1973 = vmul.f32 %v1965, %v1972
        %v1974 = vlaneseq
        %v1975 = vshrl.u32 %v1974, 7
        %v1976 = vsub.s32 0, %v1975
        %v1977 = vrot.slane %v1959, %v1976
        %v1978 = vmul.f32 %v1973, %v1977
        %v1979 = vlaneseq
        %v1980 = vshrl.u32 %v1979, 7
        %v1981 = vsub.s32 0, %v1980
        %v1982 = vrot.slane %v1960, %v1981
        %v1983 = vadd.f32 %v1978, %v1982
        %v1984 = vpack.c.bf16 %v1983, %v1983
        %v1985 = vld [vmem:[%s3 + $0x15] sm:$0x1]
        %v1986 = vlaneseq
        %v1987 = vshrl.u32 %v1986, 7
        %v1988 = vsub.s32 0, %v1987
        %v1989 = vrot.slane %v1985, %v1988
        %v1994 = vunpack.c.l.b16 %v1363
        %v1995 = vunpack.c.l.b16 %v1364
        %v1996 = vunpack.c.l.b16 %v1365
        %v1997 = vunpack.c.l.b16 %v1366
        %v1998 = vpack.c.b16 %v1995, %v1994
        %v1999 = vpack.c.b16 %v1997, %v1996
        %v2003 = vsel %vm291, %v1984, 0
        %2005 = vmatprep.subr.bf16.mxu0 0
        %2006 = vmatpush1.bf16.msra.mxu0 %v1998
        %2007 = vmatprep.subr.bf16.mxu0 0
        %2008 = vmatpush1.bf16.msra.mxu0 %v1999
        %2009 = vmatprep.subr.bf16.mxu0 0
        %2010 = vmatpush1.bf16.msra.mxu0 0
        %2011 = vmatprep.subr.bf16.mxu0 0
        %2012 = vmatpush1.bf16.msra.mxu0 0
        %2013 = vmatprep.subr.bf16.mxu0 0
        %2014 = vmatpush1.bf16.msra.mxu0 0
        %2015 = vmatprep.subr.bf16.mxu0 0
        %2016 = vmatpush1.bf16.msra.mxu0 0
        %2017 = vmatprep.subr.bf16.mxu0 0
        %2018 = vmatpush1.bf16.msra.mxu0 0
        %2019 = vmatprep.subr.bf16.mxu0 0
        %2020 = vmatpush1.bf16.msra.mxu0 0
        %2021 = vmatprep.subr.bf16.mxu0 0
        %2022 = vmatpush1.bf16.msra.mxu0 0
        %2023 = vmatprep.subr.bf16.mxu0 0
        %2024 = vmatpush1.bf16.msra.mxu0 0
        %2025 = vmatprep.subr.bf16.mxu0 0
        %2026 = vmatpush1.bf16.msra.mxu0 0
        %2027 = vmatprep.subr.bf16.mxu0 0
        %2028 = vmatpush1.bf16.msra.mxu0 0
        %2029 = vmatprep.subr.bf16.mxu0 0
        %2030 = vmatpush1.bf16.msra.mxu0 0
        %2031 = vmatprep.subr.bf16.mxu0 0
        %2032 = vmatpush1.bf16.msra.mxu0 0
        %2033 = vmatprep.subr.bf16.mxu0 0
        %2034 = vmatpush1.bf16.msra.mxu0 0
        %2035 = vmatprep.subr.bf16.mxu0 0
        %2036 = vmatpush1.bf16.msra.mxu0 0
        %2037 = vmatprep.mubr.bf16.mxu0 0
        %2038 = vmatmul.mubr.bf16.gmra.mrb[0].mxu0 %v2003
        %v2039 = vpop.f32.mrb[0].mxu0
        %v2040 = vadd.f32 %v1989, %v2039
        %v2041 = vpop.f32.mrb[0].mxu0
        %v2042 = vpop.f32.mrb[0].mxu0
        %v2043 = vpop.f32.mrb[0].mxu0
        %2044 = vdwg.mxu0
        %v2045 = vmax.f32 %v2040, 0.0
        %v2046 = vpack.c.bf16 %v2045, %v2045
        %v2047 = vld [vmem:[%s3 + $0x16] sm:$0x1]
        %v2048 = vlaneseq
        %v2049 = vshrl.u32 %v2048, 7
        %v2050 = vsub.s32 0, %v2049
        %v2051 = vrot.slane %v2047, %v2050
        %v2068 = vunpack.c.l.b16 %v1367
        %v2069 = vunpack.c.l.b16 %v1368
        %v2070 = vunpack.c.l.b16 %v1369
        %v2071 = vunpack.c.l.b16 %v1370
        %v2072 = vunpack.c.l.b16 %v1371
        %v2073 = vunpack.c.l.b16 %v1372
        %v2074 = vunpack.c.l.b16 %v1373
        %v2075 = vunpack.c.l.b16 %v1374
        %v2076 = vunpack.c.l.b16 %v1375
        %v2077 = vunpack.c.l.b16 %v1376
        %v2078 = vunpack.c.l.b16 %v1377
        %v2079 = vunpack.c.l.b16 %v1378
        %v2080 = vunpack.c.l.b16 %v1379
        %v2081 = vunpack.c.l.b16 %v1380
        %v2082 = vunpack.c.l.b16 %v1381
        %v2083 = vunpack.c.l.b16 %v1382
        %v2084 = vpack.c.b16 %v2069, %v2068
        %v2085 = vpack.c.b16 %v2071, %v2070
        %v2086 = vpack.c.b16 %v2073, %v2072
        %v2087 = vpack.c.b16 %v2075, %v2074
        %v2088 = vpack.c.b16 %v2077, %v2076
        %v2089 = vpack.c.b16 %v2079, %v2078
        %v2090 = vpack.c.b16 %v2081, %v2080
        %v2091 = vpack.c.b16 %v2083, %v2082
        %2100 = vmatprep.subr.bf16.mxu0 0
        %2101 = vmatpush1.bf16.msra.mxu0 %v2084
        %2102 = vmatprep.subr.bf16.mxu0 0
        %2103 = vmatpush1.bf16.msra.mxu0 %v2085
        %2104 = vmatprep.subr.bf16.mxu0 0
        %2105 = vmatpush1.bf16.msra.mxu0 %v2086
        %2106 = vmatprep.subr.bf16.mxu0 0
        %2107 = vmatpush1.bf16.msra.mxu0 %v2087
        %2108 = vmatprep.subr.bf16.mxu0 0
        %2109 = vmatpush1.bf16.msra.mxu0 %v2088
        %2110 = vmatprep.subr.bf16.mxu0 0
        %2111 = vmatpush1.bf16.msra.mxu0 %v2089
        %2112 = vmatprep.subr.bf16.mxu0 0
        %2113 = vmatpush1.bf16.msra.mxu0 %v2090
        %2114 = vmatprep.subr.bf16.mxu0 0
        %2115 = vmatpush1.bf16.msra.mxu0 %v2091
        %2116 = vmatprep.subr.bf16.mxu0 0
        %2117 = vmatpush1.bf16.msra.mxu0 0
        %2118 = vmatprep.subr.bf16.mxu0 0
        %2119 = vmatpush1.bf16.msra.mxu0 0
        %2120 = vmatprep.subr.bf16.mxu0 0
        %2121 = vmatpush1.bf16.msra.mxu0 0
        %2122 = vmatprep.subr.bf16.mxu0 0
        %2123 = vmatpush1.bf16.msra.mxu0 0
        %2124 = vmatprep.subr.bf16.mxu0 0
        %2125 = vmatpush1.bf16.msra.mxu0 0
        %2126 = vmatprep.subr.bf16.mxu0 0
        %2127 = vmatpush1.bf16.msra.mxu0 0
        %2128 = vmatprep.subr.bf16.mxu0 0
        %2129 = vmatpush1.bf16.msra.mxu0 0
        %2130 = vmatprep.subr.bf16.mxu0 0
        %2131 = vmatpush1.bf16.msra.mxu0 0
        %2132 = vmatprep.mubr.bf16.mxu0 0
        %2133 = vmatmul.mubr.bf16.gmra.mrb[0].mxu0 %v2046
        %v2134 = vpop.f32.mrb[0].mxu0
        %v2135 = vadd.f32 %v2051, %v2134
        %v2136 = vpop.f32.mrb[0].mxu0
        %v2137 = vpop.f32.mrb[0].mxu0
        %v2138 = vpop.f32.mrb[0].mxu0
        %2139 = vdwg.mxu0
        %v2140 = vadd.f32 %v1983, %v2135
        %v2141 = vld [vmem:[%s3 + $0x19] sm:$0x1]
        %v2142 = vld [vmem:[%s3 + $0x1a] sm:$0x1]
        %v2143 = vsel %vm291, %v2140, 0.0
        %2144 = vadd.xlane.f32.xlu0 %v2143
        %v2145 = vpop.xlane.xlu0 %2144
        %v2146 = vmul.f32 %v2145, %v1156
        %v2147 = vsub.f32 %v2140, %v2146
        %v2148 = vmul.f32 %v2147, %v2147
        %v2149 = vsel %vm291, %v2148, 0.0
        %2150 = vadd.xlane.f32.xlu0 %v2149
        %v2151 = vpop.xlane.xlu0 %2150
        %v2152 = vmul.f32 %v2151, %v1156
        %v2153 = vadd.f32 %v2152, 1e-05
        %v2154 = vrsqrt.pop %v2153
        %v2155 = vmul.f32 %v2147, %v2154
        %v2156 = vlaneseq
        %v2157 = vshrl.u32 %v2156, 7
        %v2158 = vsub.s32 0, %v2157
        %v2159 = vrot.slane %v2141, %v2158
        %v2160 = vmul.f32 %v2155, %v2159
        %v2161 = vlaneseq
        %v2162 = vshrl.u32 %v2161, 7
        %v2163 = vsub.s32 0, %v2162
        %v2164 = vrot.slane %v2142, %v2163
        %v2165 = vadd.f32 %v2160, %v2164
        %2166 = vst.msk [vmem:[%s206] sm:$0xff] %vm291, %v2165
        %s2167 = sand.u32 %s116, 1
        %s2168 = scalar_lea.sflag [#allocation5], %s2167
        %s2169 = sand.u32 %s116, 1
        %s2170 = smul.addr %s2169, 8
        %s2171 = scalar_lea.vmem [#allocation6], %s2170
        // Predicated region
        $region41: #{meg_encoder_forward.1} parent=35 // pred_check
          %p2172 = pneg %p126
        $region42: #{meg_encoder_forward.1} parent=35 // pred_check_branch
          %2174 = sbr.rel (%p2172) target = $region44
        $region43: #{meg_encoder_forward.1} parent=35 // pred_region
          %s2176 = ssub.s32 128, 128
          %2177 = vsyncadd %s2168, %s2176
          %s2178 = smul.addr %s19, 128
          %s2179 = scalar_lea.hbm %s4, %s2178
          %s2181 = sshll.u32 %s2171, 4
          %s2182 = int_to_ptr.vmem [resolvable:$true] %s2181
          %2184 = dma.vmem_to_hbm [thread:$0]  %s2182, 128, %s2179, %s2168
        $region44: #{meg_encoder_forward.1} parent=35 // pred_fallthru
          _
      $region36: #{meg_encoder_forward.1} parent=5 // pred_fallthru
        _
      %p2185 = scmp.le.s32.totalorder 2, %s14
      // Predicated region
      $region45: #{meg_encoder_forward.1} parent=5 // pred_check
        %p2186 = pneg %p2185
      $region46: #{meg_encoder_forward.1} parent=5 // pred_check_branch
        %2188 = sbr.rel (%p2186) target = $region48
      $region47: #{meg_encoder_forward.1} parent=5 // pred_region
        %s2189 = ssub.s32 %s14, 2
        // Predicated region
        $region49: #{meg_encoder_forward.1} parent=47 // pred_check
          %p2190 = pneg %p132
        $region50: #{meg_encoder_forward.1} parent=47 // pred_check_branch
          %2192 = sbr.rel (%p2190) target = $region52
        $region51: #{meg_encoder_forward.1} parent=47 // pred_region
          %s2193 = sand.u32 %s117, 1
          %s2194 = scalar_lea.sflag [#allocation5], %s2193
          %s2195 = sand.u32 %s117, 1
          %s2196 = smul.addr %s2195, 8
          %s2197 = scalar_lea.vmem [#allocation6], %s2196
          %2198 = dma.done %s2194, 128
        $region52: #{meg_encoder_forward.1} parent=47 // pred_fallthru
          _
      $region48: #{meg_encoder_forward.1} parent=5 // pred_fallthru
        _
    $region6: #{meg_encoder_forward.1} parent=1 // loop_footer
      %s18 = sadd.s32 1, %s14
    $region7: #{meg_encoder_forward.1} parent=1 // loop_footer_branch
      %13 = sbr.rel target = $region3
    $region8: #{meg_encoder_forward.1} parent=1 // loop_exit
      _
    %2199 = vsyncpa [#allocation4], 1
    %s2200 = scalar_lea.sflag [#allocation4], 1
    %2201 = vsyncpa %s2200, 1
    %2202 = vsyncpa [#allocation5], 1
    %s2203 = scalar_lea.sflag [#allocation5], 1
    %2204 = vsyncpa %s2203, 1

</llo_original>
